<compile_context>
chip_gen: v6e
topology: v6e:2x2x1
jax: 0.10.0
libtpu: 0.0.40
codegen_flags: <defaults>
</compile_context>

<pallas_src>
import functools

import jax
import jax.numpy as jnp
from jax import lax
from jax.experimental import pallas as pl
from jax.experimental.pallas import tpu as pltpu

# Model sizes (RNNLFR defaults + small hidden size)
X_SIZE, U_SIZE, Y_SIZE, W_SIZE, Z_SIZE = 2, 1, 1, 1, 1
HIDDEN = 32

# Row layout of the per-step SMEM table (shape (5, N)).
_PRE_ZU_NEXT, _PRE_DYU_U, _PRE_BU0_U, _PRE_BU1_U, _PRE_TGT = range(5)

# Index layout of the packed scalar SMEM table (shape (14,)).
(_CZA0, _CZA1, _CZBW,          # folded Cz.A (2) and Cz.Bw (1)
 _CY0, _CY1, _DYW,
 _A00, _A01, _A10, _A11,
 _BW0, _BW1,
 _B2, _Z0) = range(14)          # fc2 bias, z_0 = Dzu*u_0
_N_SC = 14


def rnnlfr_closure_kernel(pre_ref,   # SMEM (5, N) per-step table
                          sc_ref,    # SMEM (14,) packed scalars
                          mlp_ref,   # VMEM (3, HIDDEN): [fc1_w, fc1_b, fc2_w]
                          out_ref,   # VMEM (1, 1): mean loss
                          *, unroll):
    n_steps = pre_ref.shape[1]

    # --- load the (3, HIDDEN) MLP slab once; rows stay resident in vregs ----
    mlp = mlp_ref[...]            # (3, HIDDEN) f32
    w1 = mlp[0:1, :]              # (1, HIDDEN) fc1 weight (z_size == 1)
    b1 = mlp[1:2, :]              # (1, HIDDEN) fc1 bias
    w2 = mlp[2:3, :]              # (1, HIDDEN) fc2 weight (w_size == 1)

    # --- hoist every loop-invariant scalar into a (1,1) vreg value once ------
    def cvec(idx):
        return jnp.full((1, 1), sc_ref[idx], dtype=jnp.float32)

    cza0, cza1, czbw = cvec(_CZA0), cvec(_CZA1), cvec(_CZBW)
    cy0, cy1, dyw = cvec(_CY0), cvec(_CY1), cvec(_DYW)
    a00, a01, a10, a11 = cvec(_A00), cvec(_A01), cvec(_A10), cvec(_A11)
    bw0, bw1 = cvec(_BW0), cvec(_BW1)
    b2 = cvec(_B2)
    z0 = cvec(_Z0)                # z_0 = Dzu*u_0   (x_0 == 0)

    zero = jnp.zeros((1, 1), jnp.float32)

    def step(t, carry):
        # All carried values are (1,1) f32 vector values -> no vreg<->sreg
        # crossings anywhere on the recurrence.
        x0, x1, z, loss = carry

        # --- critical chain: w_t = fc2(relu(fc1(z_t))) -----------------------
        h = jnp.maximum(z * w1 + b1, 0.0)                       # (1, HIDDEN)
        w = jnp.sum(h * w2, axis=-1, keepdims=True) + b2        # (1, 1)

        # --- folded next z: only (czbw*w + ...) waits on w -------------------
        z_next = (cza0 * x0 + cza1 * x1
                  + pre_ref[_PRE_ZU_NEXT, t]) + czbw * w

        # --- off-chain: loss side --------------------------------------------
        y = cy0 * x0 + cy1 * x1 + dyw * w + pre_ref[_PRE_DYU_U, t]
        d = y - pre_ref[_PRE_TGT, t]
        loss = loss + d * d

        # --- off-chain: state update (no longer gates z_{t+1}) ---------------
        nx0 = a00 * x0 + a01 * x1 + bw0 * w + pre_ref[_PRE_BU0_U, t]
        nx1 = a10 * x0 + a11 * x1 + bw1 * w + pre_ref[_PRE_BU1_U, t]

        return (nx0, nx1, z_next, loss)

    _, _, _, total = lax.fori_loop(0, n_steps, step,
                                   (zero, zero, z0, zero), unroll=unroll)
    out_ref[...] = total * jnp.float32(1.0 / n_steps)


def model_closure_loss(u_seq, y_target, params):
    """Scalar mean MSE loss of ModelClosure.forward(), via the Pallas kernel."""
    p = params
    u = u_seq.astype(jnp.float32).reshape(-1)
    tgt = y_target.astype(jnp.float32).reshape(-1)
    n = u.shape[0]

    a = p["A"].astype(jnp.float32)
    bu = p["Bu"].astype(jnp.float32)
    bw = p["Bw"].astype(jnp.float32)
    cy = p["Cy"].astype(jnp.float32)
    dyu = p["Dyu"].astype(jnp.float32)
    dyw = p["Dyw"].astype(jnp.float32)
    cz = p["Cz"].astype(jnp.float32)
    dzu_s = p["Dzu"].astype(jnp.float32)[0, 0]
    cz0, cz1 = cz[0, 0], cz[0, 1]

    # Folded coefficients:  z_{t+1} = CzA.x_t + CzBw.w_t + (CzBu.u_t + Dzu.u_{t+1})
    cza0 = cz0 * a[0, 0] + cz1 * a[1, 0]
    cza1 = cz0 * a[0, 1] + cz1 * a[1, 1]
    czbw = cz0 * bw[0, 0] + cz1 * bw[1, 0]
    czbu = cz0 * bu[0, 0] + cz1 * bu[1, 0]

    # Per-step table (one fused vectorized pass, off the serial path).
    u_next = jnp.concatenate([u[1:], jnp.zeros((1,), jnp.float32)])  # u_N := 0 (z_N unused)
    pre = jnp.stack([
        czbu * u + dzu_s * u_next,    # zu_next[t]
        dyu[0, 0] * u,                # Dyu*u_t
        bu[0, 0] * u,                 # Bu0*u_t
        bu[1, 0] * u,                 # Bu1*u_t
        tgt,                          # target_t
    ]).astype(jnp.float32)            # (5, N)

    # Packed state-space scalars (+ folded coeffs, fc2 bias, z_0).
    sc = jnp.stack([
        cza0, cza1, czbw,
        cy[0, 0], cy[0, 1], dyw[0, 0],
        a[0, 0], a[0, 1], a[1, 0], a[1, 1],
        bw[0, 0], bw[1, 0],
        p["fc2_b"].astype(jnp.float32)[0],
        dzu_s * u[0],                 # z_0 (x_0 == 0)
    ]).astype(jnp.float32)            # (14,)

    # MLP slab: rows = fc1_w, fc1_b, fc2_w  (all length HIDDEN).
    mlp = jnp.stack([p["fc1_w"][:, 0], p["fc1_b"], p["fc2_w"][0, :]]
                    ).astype(jnp.float32)                       # (3, HIDDEN)

    unroll = n if n <= 64 else 8      # full unroll for short sequences

    loss = pl.pallas_call(
        functools.partial(rnnlfr_closure_kernel, unroll=unroll),
        out_shape=jax.ShapeDtypeStruct((1, 1), jnp.float32),
        in_specs=[pl.BlockSpec(memory_space=pltpu.MemorySpace.SMEM),
                  pl.BlockSpec(memory_space=pltpu.MemorySpace.SMEM),
                  pl.BlockSpec(memory_space=pltpu.MemorySpace.VMEM)],
        out_specs=pl.BlockSpec(memory_space=pltpu.MemorySpace.VMEM),
    )(pre, sc, mlp)
    return loss[0, 0]


def init_params(key):
    """Deterministic, PyTorch-Linear-like init (uniform(-1/sqrt(fan_in), ...)).

    Weights are kept in the PyTorch (out, in) layout.
    """
    def lin(k, out_dim, in_dim):
        bound = 1.0 / jnp.sqrt(jnp.float32(in_dim))
        return jax.random.uniform(k, (out_dim, in_dim), jnp.float32, -bound, bound)

    ks = jax.random.split(key, 13)
    b2 = 1.0 / jnp.sqrt(jnp.float32(HIDDEN))
    return {
        "A":   lin(ks[0], X_SIZE, X_SIZE),
        "Bu":  lin(ks[1], X_SIZE, U_SIZE),
        "Bw":  lin(ks[2], X_SIZE, W_SIZE),
        "Cy":  lin(ks[3], Y_SIZE, X_SIZE),
        "Dyu": lin(ks[4], Y_SIZE, U_SIZE),
        "Dyw": lin(ks[5], Y_SIZE, W_SIZE),
        "Cz":  lin(ks[6], Z_SIZE, X_SIZE),
        "Dzu": lin(ks[7], Z_SIZE, U_SIZE),
        # (Dzw exists in the module but is unused by forward().)
        "fc1_w": lin(ks[8], HIDDEN, Z_SIZE),
        "fc1_b": jax.random.uniform(ks[9], (HIDDEN,), jnp.float32, -1.0, 1.0),
        "fc2_w": lin(ks[10], W_SIZE, HIDDEN),
        "fc2_b": jax.random.uniform(ks[11], (W_SIZE,), jnp.float32, -b2, b2),
    }


def reference_loss(u_seq, y_target, p):
    """Pure-JAX reference of ModelClosure.forward() for sanity checking."""
    def step(x, inp):
        u, tgt = inp
        uvec = u.reshape(1, U_SIZE)
        z = x @ p["Cz"].T + uvec @ p["Dzu"].T
        h = jnp.maximum(z @ p["fc1_w"].T + p["fc1_b"], 0.0)
        w = h @ p["fc2_w"].T + p["fc2_b"]
        y = x @ p["Cy"].T + uvec @ p["Dyu"].T + w @ p["Dyw"].T
        l = (y[0, 0] - tgt) ** 2
        x_new = x @ p["A"].T + uvec @ p["Bu"].T + w @ p["Bw"].T
        return x_new, l

    x0 = jnp.zeros((1, X_SIZE), jnp.float32)
    _, losses = lax.scan(step, x0, (u_seq, y_target))
    return jnp.mean(losses)


if __name__ == "__main__":
    N = 16  # data_length
    key = jax.random.PRNGKey(0)
    k_params, k_u, k_y = jax.random.split(key, 3)

    params = init_params(k_params)
    input_train = jax.random.normal(k_u, (N,), jnp.float32)
    output_train = jax.random.normal(k_y, (N,), jnp.float32)

    loss = jax.jit(model_closure_loss)(input_train, output_train, params)
    loss = jax.block_until_ready(loss)

    ref = reference_loss(input_train, output_train, params)
    # rtol loosened slightly vs. the unfolded version: the CzA/CzBw algebraic
    # fold legitimately re-associates the float32 sums.
    assert jnp.allclose(loss, ref, rtol=1e-3, atol=1e-5), (loss, ref)

    print("KERNEL_OK")
</pallas_src>

<mosaic_0001>
module attributes {stable_mosaic.version = 11 : i64} {
  func.func @rnnlfr_closure_kernel(%arg0: memref<5x16xf32, #tpu.memory_space<smem>>, %arg1: memref<14xf32, #tpu.memory_space<smem>>, %arg2: memref<3x32xf32, #tpu.memory_space<vmem>>, %arg3: memref<1x1xf32, #tpu.memory_space<vmem>>) attributes {dimension_semantics = [], scalar_prefetch = 0 : i64, scratch_operands = 0 : i64, tpu.core_type = #tpu.core_type<tc>} {
    %c0 = arith.constant 0 : index
    %c0_0 = arith.constant 0 : index
    %0 = vector.load %arg2[%c0, %c0_0] : memref<3x32xf32, #tpu.memory_space<vmem>>, vector<3x32xf32>
    %1 = vector.extract_strided_slice %0 {offsets = [0, 0], sizes = [1, 32], strides = [1, 1]} : vector<3x32xf32> to vector<1x32xf32>
    %2 = vector.extract_strided_slice %0 {offsets = [1, 0], sizes = [1, 32], strides = [1, 1]} : vector<3x32xf32> to vector<1x32xf32>
    %3 = vector.extract_strided_slice %0 {offsets = [2, 0], sizes = [1, 32], strides = [1, 1]} : vector<3x32xf32> to vector<1x32xf32>
    %c0_1 = arith.constant 0 : index
    %4 = memref.load %arg1[%c0_1] : memref<14xf32, #tpu.memory_space<smem>>
    %5 = vector.broadcast %4 : f32 to vector<1x1xf32>
    %c1 = arith.constant 1 : index
    %6 = memref.load %arg1[%c1] : memref<14xf32, #tpu.memory_space<smem>>
    %7 = vector.broadcast %6 : f32 to vector<1x1xf32>
    %c2 = arith.constant 2 : index
    %8 = memref.load %arg1[%c2] : memref<14xf32, #tpu.memory_space<smem>>
    %9 = vector.broadcast %8 : f32 to vector<1x1xf32>
    %c3 = arith.constant 3 : index
    %10 = memref.load %arg1[%c3] : memref<14xf32, #tpu.memory_space<smem>>
    %11 = vector.broadcast %10 : f32 to vector<1x1xf32>
    %c4 = arith.constant 4 : index
    %12 = memref.load %arg1[%c4] : memref<14xf32, #tpu.memory_space<smem>>
    %13 = vector.broadcast %12 : f32 to vector<1x1xf32>
    %c5 = arith.constant 5 : index
    %14 = memref.load %arg1[%c5] : memref<14xf32, #tpu.memory_space<smem>>
    %15 = vector.broadcast %14 : f32 to vector<1x1xf32>
    %c6 = arith.constant 6 : index
    %16 = memref.load %arg1[%c6] : memref<14xf32, #tpu.memory_space<smem>>
    %17 = vector.broadcast %16 : f32 to vector<1x1xf32>
    %c7 = arith.constant 7 : index
    %18 = memref.load %arg1[%c7] : memref<14xf32, #tpu.memory_space<smem>>
    %19 = vector.broadcast %18 : f32 to vector<1x1xf32>
    %c8 = arith.constant 8 : index
    %20 = memref.load %arg1[%c8] : memref<14xf32, #tpu.memory_space<smem>>
    %21 = vector.broadcast %20 : f32 to vector<1x1xf32>
    %c9 = arith.constant 9 : index
    %22 = memref.load %arg1[%c9] : memref<14xf32, #tpu.memory_space<smem>>
    %23 = vector.broadcast %22 : f32 to vector<1x1xf32>
    %c10 = arith.constant 10 : index
    %24 = memref.load %arg1[%c10] : memref<14xf32, #tpu.memory_space<smem>>
    %25 = vector.broadcast %24 : f32 to vector<1x1xf32>
    %c11 = arith.constant 11 : index
    %26 = memref.load %arg1[%c11] : memref<14xf32, #tpu.memory_space<smem>>
    %27 = vector.broadcast %26 : f32 to vector<1x1xf32>
    %c12 = arith.constant 12 : index
    %28 = memref.load %arg1[%c12] : memref<14xf32, #tpu.memory_space<smem>>
    %29 = vector.broadcast %28 : f32 to vector<1x1xf32>
    %c13 = arith.constant 13 : index
    %30 = memref.load %arg1[%c13] : memref<14xf32, #tpu.memory_space<smem>>
    %31 = vector.broadcast %30 : f32 to vector<1x1xf32>
    %cst = arith.constant 0.000000e+00 : f32
    %32 = vector.broadcast %cst : f32 to vector<1x1xf32>
    %c0_i32 = arith.constant 0 : i32
    %33 = vector.broadcast %31 : vector<1x1xf32> to vector<1x32xf32>
    %34 = arith.mulf %33, %1 : vector<1x32xf32>
    %35 = arith.addf %34, %2 : vector<1x32xf32>
    %cst_2 = arith.constant 0.000000e+00 : f32
    %36 = vector.broadcast %cst_2 : f32 to vector<1x32xf32>
    %37 = arith.maximumf %35, %36 : vector<1x32xf32>
    %38 = arith.mulf %37, %3 : vector<1x32xf32>
    %cst_3 = arith.constant dense<0.000000e+00> : vector<1xf32>
    %39 = vector.multi_reduction <add>, %38, %cst_3 [1] : vector<1x32xf32> to vector<1xf32>
    %40 = vector.shape_cast %39 : vector<1xf32> to vector<1x1xf32>
    %41 = arith.addf %40, %29 : vector<1x1xf32>
    %42 = arith.mulf %5, %32 : vector<1x1xf32>
    %43 = arith.mulf %7, %32 : vector<1x1xf32>
    %44 = arith.addf %42, %43 : vector<1x1xf32>
    %c0_4 = arith.constant 0 : index
    %45 = arith.index_cast %c0_i32 : i32 to index
    %46 = memref.load %arg0[%c0_4, %45] : memref<5x16xf32, #tpu.memory_space<smem>>
    %47 = vector.broadcast %46 : f32 to vector<1x1xf32>
    %48 = arith.addf %44, %47 : vector<1x1xf32>
    %49 = arith.mulf %9, %41 : vector<1x1xf32>
    %50 = arith.addf %48, %49 : vector<1x1xf32>
    %51 = arith.mulf %11, %32 : vector<1x1xf32>
    %52 = arith.mulf %13, %32 : vector<1x1xf32>
    %53 = arith.addf %51, %52 : vector<1x1xf32>
    %54 = arith.mulf %15, %41 : vector<1x1xf32>
    %55 = arith.addf %53, %54 : vector<1x1xf32>
    %c1_5 = arith.constant 1 : index
    %56 = arith.index_cast %c0_i32 : i32 to index
    %57 = memref.load %arg0[%c1_5, %56] : memref<5x16xf32, #tpu.memory_space<smem>>
    %58 = vector.broadcast %57 : f32 to vector<1x1xf32>
    %59 = arith.addf %55, %58 : vector<1x1xf32>
    %c4_6 = arith.constant 4 : index
    %60 = arith.index_cast %c0_i32 : i32 to index
    %61 = memref.load %arg0[%c4_6, %60] : memref<5x16xf32, #tpu.memory_space<smem>>
    %62 = vector.broadcast %61 : f32 to vector<1x1xf32>
    %63 = arith.subf %59, %62 : vector<1x1xf32>
    %64 = arith.mulf %63, %63 : vector<1x1xf32>
    %65 = arith.addf %32, %64 : vector<1x1xf32>
    %66 = arith.mulf %17, %32 : vector<1x1xf32>
    %67 = arith.mulf %19, %32 : vector<1x1xf32>
    %68 = arith.addf %66, %67 : vector<1x1xf32>
    %69 = arith.mulf %25, %41 : vector<1x1xf32>
    %70 = arith.addf %68, %69 : vector<1x1xf32>
    %c2_7 = arith.constant 2 : index
    %71 = arith.index_cast %c0_i32 : i32 to index
    %72 = memref.load %arg0[%c2_7, %71] : memref<5x16xf32, #tpu.memory_space<smem>>
    %73 = vector.broadcast %72 : f32 to vector<1x1xf32>
    %74 = arith.addf %70, %73 : vector<1x1xf32>
    %75 = arith.mulf %21, %32 : vector<1x1xf32>
    %76 = arith.mulf %23, %32 : vector<1x1xf32>
    %77 = arith.addf %75, %76 : vector<1x1xf32>
    %78 = arith.mulf %27, %41 : vector<1x1xf32>
    %79 = arith.addf %77, %78 : vector<1x1xf32>
    %c3_8 = arith.constant 3 : index
    %80 = arith.index_cast %c0_i32 : i32 to index
    %81 = memref.load %arg0[%c3_8, %80] : memref<5x16xf32, #tpu.memory_space<smem>>
    %82 = vector.broadcast %81 : f32 to vector<1x1xf32>
    %83 = arith.addf %79, %82 : vector<1x1xf32>
    %c1_i32 = arith.constant 1 : i32
    %84 = vector.broadcast %50 : vector<1x1xf32> to vector<1x32xf32>
    %85 = arith.mulf %84, %1 : vector<1x32xf32>
    %86 = arith.addf %85, %2 : vector<1x32xf32>
    %cst_9 = arith.constant 0.000000e+00 : f32
    %87 = vector.broadcast %cst_9 : f32 to vector<1x32xf32>
    %88 = arith.maximumf %86, %87 : vector<1x32xf32>
    %89 = arith.mulf %88, %3 : vector<1x32xf32>
    %cst_10 = arith.constant dense<0.000000e+00> : vector<1xf32>
    %90 = vector.multi_reduction <add>, %89, %cst_10 [1] : vector<1x32xf32> to vector<1xf32>
    %91 = vector.shape_cast %90 : vector<1xf32> to vector<1x1xf32>
    %92 = arith.addf %91, %29 : vector<1x1xf32>
    %93 = arith.mulf %5, %74 : vector<1x1xf32>
    %94 = arith.mulf %7, %83 : vector<1x1xf32>
    %95 = arith.addf %93, %94 : vector<1x1xf32>
    %c0_11 = arith.constant 0 : index
    %96 = arith.index_cast %c1_i32 : i32 to index
    %97 = memref.load %arg0[%c0_11, %96] : memref<5x16xf32, #tpu.memory_space<smem>>
    %98 = vector.broadcast %97 : f32 to vector<1x1xf32>
    %99 = arith.addf %95, %98 : vector<1x1xf32>
    %100 = arith.mulf %9, %92 : vector<1x1xf32>
    %101 = arith.addf %99, %100 : vector<1x1xf32>
    %102 = arith.mulf %11, %74 : vector<1x1xf32>
    %103 = arith.mulf %13, %83 : vector<1x1xf32>
    %104 = arith.addf %102, %103 : vector<1x1xf32>
    %105 = arith.mulf %15, %92 : vector<1x1xf32>
    %106 = arith.addf %104, %105 : vector<1x1xf32>
    %c1_12 = arith.constant 1 : index
    %107 = arith.index_cast %c1_i32 : i32 to index
    %108 = memref.load %arg0[%c1_12, %107] : memref<5x16xf32, #tpu.memory_space<smem>>
    %109 = vector.broadcast %108 : f32 to vector<1x1xf32>
    %110 = arith.addf %106, %109 : vector<1x1xf32>
    %c4_13 = arith.constant 4 : index
    %111 = arith.index_cast %c1_i32 : i32 to index
    %112 = memref.load %arg0[%c4_13, %111] : memref<5x16xf32, #tpu.memory_space<smem>>
    %113 = vector.broadcast %112 : f32 to vector<1x1xf32>
    %114 = arith.subf %110, %113 : vector<1x1xf32>
    %115 = arith.mulf %114, %114 : vector<1x1xf32>
    %116 = arith.addf %65, %115 : vector<1x1xf32>
    %117 = arith.mulf %17, %74 : vector<1x1xf32>
    %118 = arith.mulf %19, %83 : vector<1x1xf32>
    %119 = arith.addf %117, %118 : vector<1x1xf32>
    %120 = arith.mulf %25, %92 : vector<1x1xf32>
    %121 = arith.addf %119, %120 : vector<1x1xf32>
    %c2_14 = arith.constant 2 : index
    %122 = arith.index_cast %c1_i32 : i32 to index
    %123 = memref.load %arg0[%c2_14, %122] : memref<5x16xf32, #tpu.memory_space<smem>>
    %124 = vector.broadcast %123 : f32 to vector<1x1xf32>
    %125 = arith.addf %121, %124 : vector<1x1xf32>
    %126 = arith.mulf %21, %74 : vector<1x1xf32>
    %127 = arith.mulf %23, %83 : vector<1x1xf32>
    %128 = arith.addf %126, %127 : vector<1x1xf32>
    %129 = arith.mulf %27, %92 : vector<1x1xf32>
    %130 = arith.addf %128, %129 : vector<1x1xf32>
    %c3_15 = arith.constant 3 : index
    %131 = arith.index_cast %c1_i32 : i32 to index
    %132 = memref.load %arg0[%c3_15, %131] : memref<5x16xf32, #tpu.memory_space<smem>>
    %133 = vector.broadcast %132 : f32 to vector<1x1xf32>
    %134 = arith.addf %130, %133 : vector<1x1xf32>
    %c2_i32 = arith.constant 2 : i32
    %135 = vector.broadcast %101 : vector<1x1xf32> to vector<1x32xf32>
    %136 = arith.mulf %135, %1 : vector<1x32xf32>
    %137 = arith.addf %136, %2 : vector<1x32xf32>
    %cst_16 = arith.constant 0.000000e+00 : f32
    %138 = vector.broadcast %cst_16 : f32 to vector<1x32xf32>
    %139 = arith.maximumf %137, %138 : vector<1x32xf32>
    %140 = arith.mulf %139, %3 : vector<1x32xf32>
    %cst_17 = arith.constant dense<0.000000e+00> : vector<1xf32>
    %141 = vector.multi_reduction <add>, %140, %cst_17 [1] : vector<1x32xf32> to vector<1xf32>
    %142 = vector.shape_cast %141 : vector<1xf32> to vector<1x1xf32>
    %143 = arith.addf %142, %29 : vector<1x1xf32>
    %144 = arith.mulf %5, %125 : vector<1x1xf32>
    %145 = arith.mulf %7, %134 : vector<1x1xf32>
    %146 = arith.addf %144, %145 : vector<1x1xf32>
    %c0_18 = arith.constant 0 : index
    %147 = arith.index_cast %c2_i32 : i32 to index
    %148 = memref.load %arg0[%c0_18, %147] : memref<5x16xf32, #tpu.memory_space<smem>>
    %149 = vector.broadcast %148 : f32 to vector<1x1xf32>
    %150 = arith.addf %146, %149 : vector<1x1xf32>
    %151 = arith.mulf %9, %143 : vector<1x1xf32>
    %152 = arith.addf %150, %151 : vector<1x1xf32>
    %153 = arith.mulf %11, %125 : vector<1x1xf32>
    %154 = arith.mulf %13, %134 : vector<1x1xf32>
    %155 = arith.addf %153, %154 : vector<1x1xf32>
    %156 = arith.mulf %15, %143 : vector<1x1xf32>
    %157 = arith.addf %155, %156 : vector<1x1xf32>
    %c1_19 = arith.constant 1 : index
    %158 = arith.index_cast %c2_i32 : i32 to index
    %159 = memref.load %arg0[%c1_19, %158] : memref<5x16xf32, #tpu.memory_space<smem>>
    %160 = vector.broadcast %159 : f32 to vector<1x1xf32>
    %161 = arith.addf %157, %160 : vector<1x1xf32>
    %c4_20 = arith.constant 4 : index
    %162 = arith.index_cast %c2_i32 : i32 to index
    %163 = memref.load %arg0[%c4_20, %162] : memref<5x16xf32, #tpu.memory_space<smem>>
    %164 = vector.broadcast %163 : f32 to vector<1x1xf32>
    %165 = arith.subf %161, %164 : vector<1x1xf32>
    %166 = arith.mulf %165, %165 : vector<1x1xf32>
    %167 = arith.addf %116, %166 : vector<1x1xf32>
    %168 = arith.mulf %17, %125 : vector<1x1xf32>
    %169 = arith.mulf %19, %134 : vector<1x1xf32>
    %170 = arith.addf %168, %169 : vector<1x1xf32>
    %171 = arith.mulf %25, %143 : vector<1x1xf32>
    %172 = arith.addf %170, %171 : vector<1x1xf32>
    %c2_21 = arith.constant 2 : index
    %173 = arith.index_cast %c2_i32 : i32 to index
    %174 = memref.load %arg0[%c2_21, %173] : memref<5x16xf32, #tpu.memory_space<smem>>
    %175 = vector.broadcast %174 : f32 to vector<1x1xf32>
    %176 = arith.addf %172, %175 : vector<1x1xf32>
    %177 = arith.mulf %21, %125 : vector<1x1xf32>
    %178 = arith.mulf %23, %134 : vector<1x1xf32>
    %179 = arith.addf %177, %178 : vector<1x1xf32>
    %180 = arith.mulf %27, %143 : vector<1x1xf32>
    %181 = arith.addf %179, %180 : vector<1x1xf32>
    %c3_22 = arith.constant 3 : index
    %182 = arith.index_cast %c2_i32 : i32 to index
    %183 = memref.load %arg0[%c3_22, %182] : memref<5x16xf32, #tpu.memory_space<smem>>
    %184 = vector.broadcast %183 : f32 to vector<1x1xf32>
    %185 = arith.addf %181, %184 : vector<1x1xf32>
    %c3_i32 = arith.constant 3 : i32
    %186 = vector.broadcast %152 : vector<1x1xf32> to vector<1x32xf32>
    %187 = arith.mulf %186, %1 : vector<1x32xf32>
    %188 = arith.addf %187, %2 : vector<1x32xf32>
    %cst_23 = arith.constant 0.000000e+00 : f32
    %189 = vector.broadcast %cst_23 : f32 to vector<1x32xf32>
    %190 = arith.maximumf %188, %189 : vector<1x32xf32>
    %191 = arith.mulf %190, %3 : vector<1x32xf32>
    %cst_24 = arith.constant dense<0.000000e+00> : vector<1xf32>
    %192 = vector.multi_reduction <add>, %191, %cst_24 [1] : vector<1x32xf32> to vector<1xf32>
    %193 = vector.shape_cast %192 : vector<1xf32> to vector<1x1xf32>
    %194 = arith.addf %193, %29 : vector<1x1xf32>
    %195 = arith.mulf %5, %176 : vector<1x1xf32>
    %196 = arith.mulf %7, %185 : vector<1x1xf32>
    %197 = arith.addf %195, %196 : vector<1x1xf32>
    %c0_25 = arith.constant 0 : index
    %198 = arith.index_cast %c3_i32 : i32 to index
    %199 = memref.load %arg0[%c0_25, %198] : memref<5x16xf32, #tpu.memory_space<smem>>
    %200 = vector.broadcast %199 : f32 to vector<1x1xf32>
    %201 = arith.addf %197, %200 : vector<1x1xf32>
    %202 = arith.mulf %9, %194 : vector<1x1xf32>
    %203 = arith.addf %201, %202 : vector<1x1xf32>
    %204 = arith.mulf %11, %176 : vector<1x1xf32>
    %205 = arith.mulf %13, %185 : vector<1x1xf32>
    %206 = arith.addf %204, %205 : vector<1x1xf32>
    %207 = arith.mulf %15, %194 : vector<1x1xf32>
    %208 = arith.addf %206, %207 : vector<1x1xf32>
    %c1_26 = arith.constant 1 : index
    %209 = arith.index_cast %c3_i32 : i32 to index
    %210 = memref.load %arg0[%c1_26, %209] : memref<5x16xf32, #tpu.memory_space<smem>>
    %211 = vector.broadcast %210 : f32 to vector<1x1xf32>
    %212 = arith.addf %208, %211 : vector<1x1xf32>
    %c4_27 = arith.constant 4 : index
    %213 = arith.index_cast %c3_i32 : i32 to index
    %214 = memref.load %arg0[%c4_27, %213] : memref<5x16xf32, #tpu.memory_space<smem>>
    %215 = vector.broadcast %214 : f32 to vector<1x1xf32>
    %216 = arith.subf %212, %215 : vector<1x1xf32>
    %217 = arith.mulf %216, %216 : vector<1x1xf32>
    %218 = arith.addf %167, %217 : vector<1x1xf32>
    %219 = arith.mulf %17, %176 : vector<1x1xf32>
    %220 = arith.mulf %19, %185 : vector<1x1xf32>
    %221 = arith.addf %219, %220 : vector<1x1xf32>
    %222 = arith.mulf %25, %194 : vector<1x1xf32>
    %223 = arith.addf %221, %222 : vector<1x1xf32>
    %c2_28 = arith.constant 2 : index
    %224 = arith.index_cast %c3_i32 : i32 to index
    %225 = memref.load %arg0[%c2_28, %224] : memref<5x16xf32, #tpu.memory_space<smem>>
    %226 = vector.broadcast %225 : f32 to vector<1x1xf32>
    %227 = arith.addf %223, %226 : vector<1x1xf32>
    %228 = arith.mulf %21, %176 : vector<1x1xf32>
    %229 = arith.mulf %23, %185 : vector<1x1xf32>
    %230 = arith.addf %228, %229 : vector<1x1xf32>
    %231 = arith.mulf %27, %194 : vector<1x1xf32>
    %232 = arith.addf %230, %231 : vector<1x1xf32>
    %c3_29 = arith.constant 3 : index
    %233 = arith.index_cast %c3_i32 : i32 to index
    %234 = memref.load %arg0[%c3_29, %233] : memref<5x16xf32, #tpu.memory_space<smem>>
    %235 = vector.broadcast %234 : f32 to vector<1x1xf32>
    %236 = arith.addf %232, %235 : vector<1x1xf32>
    %c4_i32 = arith.constant 4 : i32
    %237 = vector.broadcast %203 : vector<1x1xf32> to vector<1x32xf32>
    %238 = arith.mulf %237, %1 : vector<1x32xf32>
    %239 = arith.addf %238, %2 : vector<1x32xf32>
    %cst_30 = arith.constant 0.000000e+00 : f32
    %240 = vector.broadcast %cst_30 : f32 to vector<1x32xf32>
    %241 = arith.maximumf %239, %240 : vector<1x32xf32>
    %242 = arith.mulf %241, %3 : vector<1x32xf32>
    %cst_31 = arith.constant dense<0.000000e+00> : vector<1xf32>
    %243 = vector.multi_reduction <add>, %242, %cst_31 [1] : vector<1x32xf32> to vector<1xf32>
    %244 = vector.shape_cast %243 : vector<1xf32> to vector<1x1xf32>
    %245 = arith.addf %244, %29 : vector<1x1xf32>
    %246 = arith.mulf %5, %227 : vector<1x1xf32>
    %247 = arith.mulf %7, %236 : vector<1x1xf32>
    %248 = arith.addf %246, %247 : vector<1x1xf32>
    %c0_32 = arith.constant 0 : index
    %249 = arith.index_cast %c4_i32 : i32 to index
    %250 = memref.load %arg0[%c0_32, %249] : memref<5x16xf32, #tpu.memory_space<smem>>
    %251 = vector.broadcast %250 : f32 to vector<1x1xf32>
    %252 = arith.addf %248, %251 : vector<1x1xf32>
    %253 = arith.mulf %9, %245 : vector<1x1xf32>
    %254 = arith.addf %252, %253 : vector<1x1xf32>
    %255 = arith.mulf %11, %227 : vector<1x1xf32>
    %256 = arith.mulf %13, %236 : vector<1x1xf32>
    %257 = arith.addf %255, %256 : vector<1x1xf32>
    %258 = arith.mulf %15, %245 : vector<1x1xf32>
    %259 = arith.addf %257, %258 : vector<1x1xf32>
    %c1_33 = arith.constant 1 : index
    %260 = arith.index_cast %c4_i32 : i32 to index
    %261 = memref.load %arg0[%c1_33, %260] : memref<5x16xf32, #tpu.memory_space<smem>>
    %262 = vector.broadcast %261 : f32 to vector<1x1xf32>
    %263 = arith.addf %259, %262 : vector<1x1xf32>
    %c4_34 = arith.constant 4 : index
    %264 = arith.index_cast %c4_i32 : i32 to index
    %265 = memref.load %arg0[%c4_34, %264] : memref<5x16xf32, #tpu.memory_space<smem>>
    %266 = vector.broadcast %265 : f32 to vector<1x1xf32>
    %267 = arith.subf %263, %266 : vector<1x1xf32>
    %268 = arith.mulf %267, %267 : vector<1x1xf32>
    %269 = arith.addf %218, %268 : vector<1x1xf32>
    %270 = arith.mulf %17, %227 : vector<1x1xf32>
    %271 = arith.mulf %19, %236 : vector<1x1xf32>
    %272 = arith.addf %270, %271 : vector<1x1xf32>
    %273 = arith.mulf %25, %245 : vector<1x1xf32>
    %274 = arith.addf %272, %273 : vector<1x1xf32>
    %c2_35 = arith.constant 2 : index
    %275 = arith.index_cast %c4_i32 : i32 to index
    %276 = memref.load %arg0[%c2_35, %275] : memref<5x16xf32, #tpu.memory_space<smem>>
    %277 = vector.broadcast %276 : f32 to vector<1x1xf32>
    %278 = arith.addf %274, %277 : vector<1x1xf32>
    %279 = arith.mulf %21, %227 : vector<1x1xf32>
    %280 = arith.mulf %23, %236 : vector<1x1xf32>
    %281 = arith.addf %279, %280 : vector<1x1xf32>
    %282 = arith.mulf %27, %245 : vector<1x1xf32>
    %283 = arith.addf %281, %282 : vector<1x1xf32>
    %c3_36 = arith.constant 3 : index
    %284 = arith.index_cast %c4_i32 : i32 to index
    %285 = memref.load %arg0[%c3_36, %284] : memref<5x16xf32, #tpu.memory_space<smem>>
    %286 = vector.broadcast %285 : f32 to vector<1x1xf32>
    %287 = arith.addf %283, %286 : vector<1x1xf32>
    %c5_i32 = arith.constant 5 : i32
    %288 = vector.broadcast %254 : vector<1x1xf32> to vector<1x32xf32>
    %289 = arith.mulf %288, %1 : vector<1x32xf32>
    %290 = arith.addf %289, %2 : vector<1x32xf32>
    %cst_37 = arith.constant 0.000000e+00 : f32
    %291 = vector.broadcast %cst_37 : f32 to vector<1x32xf32>
    %292 = arith.maximumf %290, %291 : vector<1x32xf32>
    %293 = arith.mulf %292, %3 : vector<1x32xf32>
    %cst_38 = arith.constant dense<0.000000e+00> : vector<1xf32>
    %294 = vector.multi_reduction <add>, %293, %cst_38 [1] : vector<1x32xf32> to vector<1xf32>
    %295 = vector.shape_cast %294 : vector<1xf32> to vector<1x1xf32>
    %296 = arith.addf %295, %29 : vector<1x1xf32>
    %297 = arith.mulf %5, %278 : vector<1x1xf32>
    %298 = arith.mulf %7, %287 : vector<1x1xf32>
    %299 = arith.addf %297, %298 : vector<1x1xf32>
    %c0_39 = arith.constant 0 : index
    %300 = arith.index_cast %c5_i32 : i32 to index
    %301 = memref.load %arg0[%c0_39, %300] : memref<5x16xf32, #tpu.memory_space<smem>>
    %302 = vector.broadcast %301 : f32 to vector<1x1xf32>
    %303 = arith.addf %299, %302 : vector<1x1xf32>
    %304 = arith.mulf %9, %296 : vector<1x1xf32>
    %305 = arith.addf %303, %304 : vector<1x1xf32>
    %306 = arith.mulf %11, %278 : vector<1x1xf32>
    %307 = arith.mulf %13, %287 : vector<1x1xf32>
    %308 = arith.addf %306, %307 : vector<1x1xf32>
    %309 = arith.mulf %15, %296 : vector<1x1xf32>
    %310 = arith.addf %308, %309 : vector<1x1xf32>
    %c1_40 = arith.constant 1 : index
    %311 = arith.index_cast %c5_i32 : i32 to index
    %312 = memref.load %arg0[%c1_40, %311] : memref<5x16xf32, #tpu.memory_space<smem>>
    %313 = vector.broadcast %312 : f32 to vector<1x1xf32>
    %314 = arith.addf %310, %313 : vector<1x1xf32>
    %c4_41 = arith.constant 4 : index
    %315 = arith.index_cast %c5_i32 : i32 to index
    %316 = memref.load %arg0[%c4_41, %315] : memref<5x16xf32, #tpu.memory_space<smem>>
    %317 = vector.broadcast %316 : f32 to vector<1x1xf32>
    %318 = arith.subf %314, %317 : vector<1x1xf32>
    %319 = arith.mulf %318, %318 : vector<1x1xf32>
    %320 = arith.addf %269, %319 : vector<1x1xf32>
    %321 = arith.mulf %17, %278 : vector<1x1xf32>
    %322 = arith.mulf %19, %287 : vector<1x1xf32>
    %323 = arith.addf %321, %322 : vector<1x1xf32>
    %324 = arith.mulf %25, %296 : vector<1x1xf32>
    %325 = arith.addf %323, %324 : vector<1x1xf32>
    %c2_42 = arith.constant 2 : index
    %326 = arith.index_cast %c5_i32 : i32 to index
    %327 = memref.load %arg0[%c2_42, %326] : memref<5x16xf32, #tpu.memory_space<smem>>
    %328 = vector.broadcast %327 : f32 to vector<1x1xf32>
    %329 = arith.addf %325, %328 : vector<1x1xf32>
    %330 = arith.mulf %21, %278 : vector<1x1xf32>
    %331 = arith.mulf %23, %287 : vector<1x1xf32>
    %332 = arith.addf %330, %331 : vector<1x1xf32>
    %333 = arith.mulf %27, %296 : vector<1x1xf32>
    %334 = arith.addf %332, %333 : vector<1x1xf32>
    %c3_43 = arith.constant 3 : index
    %335 = arith.index_cast %c5_i32 : i32 to index
    %336 = memref.load %arg0[%c3_43, %335] : memref<5x16xf32, #tpu.memory_space<smem>>
    %337 = vector.broadcast %336 : f32 to vector<1x1xf32>
    %338 = arith.addf %334, %337 : vector<1x1xf32>
    %c6_i32 = arith.constant 6 : i32
    %339 = vector.broadcast %305 : vector<1x1xf32> to vector<1x32xf32>
    %340 = arith.mulf %339, %1 : vector<1x32xf32>
    %341 = arith.addf %340, %2 : vector<1x32xf32>
    %cst_44 = arith.constant 0.000000e+00 : f32
    %342 = vector.broadcast %cst_44 : f32 to vector<1x32xf32>
    %343 = arith.maximumf %341, %342 : vector<1x32xf32>
    %344 = arith.mulf %343, %3 : vector<1x32xf32>
    %cst_45 = arith.constant dense<0.000000e+00> : vector<1xf32>
    %345 = vector.multi_reduction <add>, %344, %cst_45 [1] : vector<1x32xf32> to vector<1xf32>
    %346 = vector.shape_cast %345 : vector<1xf32> to vector<1x1xf32>
    %347 = arith.addf %346, %29 : vector<1x1xf32>
    %348 = arith.mulf %5, %329 : vector<1x1xf32>
    %349 = arith.mulf %7, %338 : vector<1x1xf32>
    %350 = arith.addf %348, %349 : vector<1x1xf32>
    %c0_46 = arith.constant 0 : index
    %351 = arith.index_cast %c6_i32 : i32 to index
    %352 = memref.load %arg0[%c0_46, %351] : memref<5x16xf32, #tpu.memory_space<smem>>
    %353 = vector.broadcast %352 : f32 to vector<1x1xf32>
    %354 = arith.addf %350, %353 : vector<1x1xf32>
    %355 = arith.mulf %9, %347 : vector<1x1xf32>
    %356 = arith.addf %354, %355 : vector<1x1xf32>
    %357 = arith.mulf %11, %329 : vector<1x1xf32>
    %358 = arith.mulf %13, %338 : vector<1x1xf32>
    %359 = arith.addf %357, %358 : vector<1x1xf32>
    %360 = arith.mulf %15, %347 : vector<1x1xf32>
    %361 = arith.addf %359, %360 : vector<1x1xf32>
    %c1_47 = arith.constant 1 : index
    %362 = arith.index_cast %c6_i32 : i32 to index
    %363 = memref.load %arg0[%c1_47, %362] : memref<5x16xf32, #tpu.memory_space<smem>>
    %364 = vector.broadcast %363 : f32 to vector<1x1xf32>
    %365 = arith.addf %361, %364 : vector<1x1xf32>
    %c4_48 = arith.constant 4 : index
    %366 = arith.index_cast %c6_i32 : i32 to index
    %367 = memref.load %arg0[%c4_48, %366] : memref<5x16xf32, #tpu.memory_space<smem>>
    %368 = vector.broadcast %367 : f32 to vector<1x1xf32>
    %369 = arith.subf %365, %368 : vector<1x1xf32>
    %370 = arith.mulf %369, %369 : vector<1x1xf32>
    %371 = arith.addf %320, %370 : vector<1x1xf32>
    %372 = arith.mulf %17, %329 : vector<1x1xf32>
    %373 = arith.mulf %19, %338 : vector<1x1xf32>
    %374 = arith.addf %372, %373 : vector<1x1xf32>
    %375 = arith.mulf %25, %347 : vector<1x1xf32>
    %376 = arith.addf %374, %375 : vector<1x1xf32>
    %c2_49 = arith.constant 2 : index
    %377 = arith.index_cast %c6_i32 : i32 to index
    %378 = memref.load %arg0[%c2_49, %377] : memref<5x16xf32, #tpu.memory_space<smem>>
    %379 = vector.broadcast %378 : f32 to vector<1x1xf32>
    %380 = arith.addf %376, %379 : vector<1x1xf32>
    %381 = arith.mulf %21, %329 : vector<1x1xf32>
    %382 = arith.mulf %23, %338 : vector<1x1xf32>
    %383 = arith.addf %381, %382 : vector<1x1xf32>
    %384 = arith.mulf %27, %347 : vector<1x1xf32>
    %385 = arith.addf %383, %384 : vector<1x1xf32>
    %c3_50 = arith.constant 3 : index
    %386 = arith.index_cast %c6_i32 : i32 to index
    %387 = memref.load %arg0[%c3_50, %386] : memref<5x16xf32, #tpu.memory_space<smem>>
    %388 = vector.broadcast %387 : f32 to vector<1x1xf32>
    %389 = arith.addf %385, %388 : vector<1x1xf32>
    %c7_i32 = arith.constant 7 : i32
    %390 = vector.broadcast %356 : vector<1x1xf32> to vector<1x32xf32>
    %391 = arith.mulf %390, %1 : vector<1x32xf32>
    %392 = arith.addf %391, %2 : vector<1x32xf32>
    %cst_51 = arith.constant 0.000000e+00 : f32
    %393 = vector.broadcast %cst_51 : f32 to vector<1x32xf32>
    %394 = arith.maximumf %392, %393 : vector<1x32xf32>
    %395 = arith.mulf %394, %3 : vector<1x32xf32>
    %cst_52 = arith.constant dense<0.000000e+00> : vector<1xf32>
    %396 = vector.multi_reduction <add>, %395, %cst_52 [1] : vector<1x32xf32> to vector<1xf32>
    %397 = vector.shape_cast %396 : vector<1xf32> to vector<1x1xf32>
    %398 = arith.addf %397, %29 : vector<1x1xf32>
    %399 = arith.mulf %5, %380 : vector<1x1xf32>
    %400 = arith.mulf %7, %389 : vector<1x1xf32>
    %401 = arith.addf %399, %400 : vector<1x1xf32>
    %c0_53 = arith.constant 0 : index
    %402 = arith.index_cast %c7_i32 : i32 to index
    %403 = memref.load %arg0[%c0_53, %402] : memref<5x16xf32, #tpu.memory_space<smem>>
    %404 = vector.broadcast %403 : f32 to vector<1x1xf32>
    %405 = arith.addf %401, %404 : vector<1x1xf32>
    %406 = arith.mulf %9, %398 : vector<1x1xf32>
    %407 = arith.addf %405, %406 : vector<1x1xf32>
    %408 = arith.mulf %11, %380 : vector<1x1xf32>
    %409 = arith.mulf %13, %389 : vector<1x1xf32>
    %410 = arith.addf %408, %409 : vector<1x1xf32>
    %411 = arith.mulf %15, %398 : vector<1x1xf32>
    %412 = arith.addf %410, %411 : vector<1x1xf32>
    %c1_54 = arith.constant 1 : index
    %413 = arith.index_cast %c7_i32 : i32 to index
    %414 = memref.load %arg0[%c1_54, %413] : memref<5x16xf32, #tpu.memory_space<smem>>
    %415 = vector.broadcast %414 : f32 to vector<1x1xf32>
    %416 = arith.addf %412, %415 : vector<1x1xf32>
    %c4_55 = arith.constant 4 : index
    %417 = arith.index_cast %c7_i32 : i32 to index
    %418 = memref.load %arg0[%c4_55, %417] : memref<5x16xf32, #tpu.memory_space<smem>>
    %419 = vector.broadcast %418 : f32 to vector<1x1xf32>
    %420 = arith.subf %416, %419 : vector<1x1xf32>
    %421 = arith.mulf %420, %420 : vector<1x1xf32>
    %422 = arith.addf %371, %421 : vector<1x1xf32>
    %423 = arith.mulf %17, %380 : vector<1x1xf32>
    %424 = arith.mulf %19, %389 : vector<1x1xf32>
    %425 = arith.addf %423, %424 : vector<1x1xf32>
    %426 = arith.mulf %25, %398 : vector<1x1xf32>
    %427 = arith.addf %425, %426 : vector<1x1xf32>
    %c2_56 = arith.constant 2 : index
    %428 = arith.index_cast %c7_i32 : i32 to index
    %429 = memref.load %arg0[%c2_56, %428] : memref<5x16xf32, #tpu.memory_space<smem>>
    %430 = vector.broadcast %429 : f32 to vector<1x1xf32>
    %431 = arith.addf %427, %430 : vector<1x1xf32>
    %432 = arith.mulf %21, %380 : vector<1x1xf32>
    %433 = arith.mulf %23, %389 : vector<1x1xf32>
    %434 = arith.addf %432, %433 : vector<1x1xf32>
    %435 = arith.mulf %27, %398 : vector<1x1xf32>
    %436 = arith.addf %434, %435 : vector<1x1xf32>
    %c3_57 = arith.constant 3 : index
    %437 = arith.index_cast %c7_i32 : i32 to index
    %438 = memref.load %arg0[%c3_57, %437] : memref<5x16xf32, #tpu.memory_space<smem>>
    %439 = vector.broadcast %438 : f32 to vector<1x1xf32>
    %440 = arith.addf %436, %439 : vector<1x1xf32>
    %c8_i32 = arith.constant 8 : i32
    %441 = vector.broadcast %407 : vector<1x1xf32> to vector<1x32xf32>
    %442 = arith.mulf %441, %1 : vector<1x32xf32>
    %443 = arith.addf %442, %2 : vector<1x32xf32>
    %cst_58 = arith.constant 0.000000e+00 : f32
    %444 = vector.broadcast %cst_58 : f32 to vector<1x32xf32>
    %445 = arith.maximumf %443, %444 : vector<1x32xf32>
    %446 = arith.mulf %445, %3 : vector<1x32xf32>
    %cst_59 = arith.constant dense<0.000000e+00> : vector<1xf32>
    %447 = vector.multi_reduction <add>, %446, %cst_59 [1] : vector<1x32xf32> to vector<1xf32>
    %448 = vector.shape_cast %447 : vector<1xf32> to vector<1x1xf32>
    %449 = arith.addf %448, %29 : vector<1x1xf32>
    %450 = arith.mulf %5, %431 : vector<1x1xf32>
    %451 = arith.mulf %7, %440 : vector<1x1xf32>
    %452 = arith.addf %450, %451 : vector<1x1xf32>
    %c0_60 = arith.constant 0 : index
    %453 = arith.index_cast %c8_i32 : i32 to index
    %454 = memref.load %arg0[%c0_60, %453] : memref<5x16xf32, #tpu.memory_space<smem>>
    %455 = vector.broadcast %454 : f32 to vector<1x1xf32>
    %456 = arith.addf %452, %455 : vector<1x1xf32>
    %457 = arith.mulf %9, %449 : vector<1x1xf32>
    %458 = arith.addf %456, %457 : vector<1x1xf32>
    %459 = arith.mulf %11, %431 : vector<1x1xf32>
    %460 = arith.mulf %13, %440 : vector<1x1xf32>
    %461 = arith.addf %459, %460 : vector<1x1xf32>
    %462 = arith.mulf %15, %449 : vector<1x1xf32>
    %463 = arith.addf %461, %462 : vector<1x1xf32>
    %c1_61 = arith.constant 1 : index
    %464 = arith.index_cast %c8_i32 : i32 to index
    %465 = memref.load %arg0[%c1_61, %464] : memref<5x16xf32, #tpu.memory_space<smem>>
    %466 = vector.broadcast %465 : f32 to vector<1x1xf32>
    %467 = arith.addf %463, %466 : vector<1x1xf32>
    %c4_62 = arith.constant 4 : index
    %468 = arith.index_cast %c8_i32 : i32 to index
    %469 = memref.load %arg0[%c4_62, %468] : memref<5x16xf32, #tpu.memory_space<smem>>
    %470 = vector.broadcast %469 : f32 to vector<1x1xf32>
    %471 = arith.subf %467, %470 : vector<1x1xf32>
    %472 = arith.mulf %471, %471 : vector<1x1xf32>
    %473 = arith.addf %422, %472 : vector<1x1xf32>
    %474 = arith.mulf %17, %431 : vector<1x1xf32>
    %475 = arith.mulf %19, %440 : vector<1x1xf32>
    %476 = arith.addf %474, %475 : vector<1x1xf32>
    %477 = arith.mulf %25, %449 : vector<1x1xf32>
    %478 = arith.addf %476, %477 : vector<1x1xf32>
    %c2_63 = arith.constant 2 : index
    %479 = arith.index_cast %c8_i32 : i32 to index
    %480 = memref.load %arg0[%c2_63, %479] : memref<5x16xf32, #tpu.memory_space<smem>>
    %481 = vector.broadcast %480 : f32 to vector<1x1xf32>
    %482 = arith.addf %478, %481 : vector<1x1xf32>
    %483 = arith.mulf %21, %431 : vector<1x1xf32>
    %484 = arith.mulf %23, %440 : vector<1x1xf32>
    %485 = arith.addf %483, %484 : vector<1x1xf32>
    %486 = arith.mulf %27, %449 : vector<1x1xf32>
    %487 = arith.addf %485, %486 : vector<1x1xf32>
    %c3_64 = arith.constant 3 : index
    %488 = arith.index_cast %c8_i32 : i32 to index
    %489 = memref.load %arg0[%c3_64, %488] : memref<5x16xf32, #tpu.memory_space<smem>>
    %490 = vector.broadcast %489 : f32 to vector<1x1xf32>
    %491 = arith.addf %487, %490 : vector<1x1xf32>
    %c9_i32 = arith.constant 9 : i32
    %492 = vector.broadcast %458 : vector<1x1xf32> to vector<1x32xf32>
    %493 = arith.mulf %492, %1 : vector<1x32xf32>
    %494 = arith.addf %493, %2 : vector<1x32xf32>
    %cst_65 = arith.constant 0.000000e+00 : f32
    %495 = vector.broadcast %cst_65 : f32 to vector<1x32xf32>
    %496 = arith.maximumf %494, %495 : vector<1x32xf32>
    %497 = arith.mulf %496, %3 : vector<1x32xf32>
    %cst_66 = arith.constant dense<0.000000e+00> : vector<1xf32>
    %498 = vector.multi_reduction <add>, %497, %cst_66 [1] : vector<1x32xf32> to vector<1xf32>
    %499 = vector.shape_cast %498 : vector<1xf32> to vector<1x1xf32>
    %500 = arith.addf %499, %29 : vector<1x1xf32>
    %501 = arith.mulf %5, %482 : vector<1x1xf32>
    %502 = arith.mulf %7, %491 : vector<1x1xf32>
    %503 = arith.addf %501, %502 : vector<1x1xf32>
    %c0_67 = arith.constant 0 : index
    %504 = arith.index_cast %c9_i32 : i32 to index
    %505 = memref.load %arg0[%c0_67, %504] : memref<5x16xf32, #tpu.memory_space<smem>>
    %506 = vector.broadcast %505 : f32 to vector<1x1xf32>
    %507 = arith.addf %503, %506 : vector<1x1xf32>
    %508 = arith.mulf %9, %500 : vector<1x1xf32>
    %509 = arith.addf %507, %508 : vector<1x1xf32>
    %510 = arith.mulf %11, %482 : vector<1x1xf32>
    %511 = arith.mulf %13, %491 : vector<1x1xf32>
    %512 = arith.addf %510, %511 : vector<1x1xf32>
    %513 = arith.mulf %15, %500 : vector<1x1xf32>
    %514 = arith.addf %512, %513 : vector<1x1xf32>
    %c1_68 = arith.constant 1 : index
    %515 = arith.index_cast %c9_i32 : i32 to index
    %516 = memref.load %arg0[%c1_68, %515] : memref<5x16xf32, #tpu.memory_space<smem>>
    %517 = vector.broadcast %516 : f32 to vector<1x1xf32>
    %518 = arith.addf %514, %517 : vector<1x1xf32>
    %c4_69 = arith.constant 4 : index
    %519 = arith.index_cast %c9_i32 : i32 to index
    %520 = memref.load %arg0[%c4_69, %519] : memref<5x16xf32, #tpu.memory_space<smem>>
    %521 = vector.broadcast %520 : f32 to vector<1x1xf32>
    %522 = arith.subf %518, %521 : vector<1x1xf32>
    %523 = arith.mulf %522, %522 : vector<1x1xf32>
    %524 = arith.addf %473, %523 : vector<1x1xf32>
    %525 = arith.mulf %17, %482 : vector<1x1xf32>
    %526 = arith.mulf %19, %491 : vector<1x1xf32>
    %527 = arith.addf %525, %526 : vector<1x1xf32>
    %528 = arith.mulf %25, %500 : vector<1x1xf32>
    %529 = arith.addf %527, %528 : vector<1x1xf32>
    %c2_70 = arith.constant 2 : index
    %530 = arith.index_cast %c9_i32 : i32 to index
    %531 = memref.load %arg0[%c2_70, %530] : memref<5x16xf32, #tpu.memory_space<smem>>
    %532 = vector.broadcast %531 : f32 to vector<1x1xf32>
    %533 = arith.addf %529, %532 : vector<1x1xf32>
    %534 = arith.mulf %21, %482 : vector<1x1xf32>
    %535 = arith.mulf %23, %491 : vector<1x1xf32>
    %536 = arith.addf %534, %535 : vector<1x1xf32>
    %537 = arith.mulf %27, %500 : vector<1x1xf32>
    %538 = arith.addf %536, %537 : vector<1x1xf32>
    %c3_71 = arith.constant 3 : index
    %539 = arith.index_cast %c9_i32 : i32 to index
    %540 = memref.load %arg0[%c3_71, %539] : memref<5x16xf32, #tpu.memory_space<smem>>
    %541 = vector.broadcast %540 : f32 to vector<1x1xf32>
    %542 = arith.addf %538, %541 : vector<1x1xf32>
    %c10_i32 = arith.constant 10 : i32
    %543 = vector.broadcast %509 : vector<1x1xf32> to vector<1x32xf32>
    %544 = arith.mulf %543, %1 : vector<1x32xf32>
    %545 = arith.addf %544, %2 : vector<1x32xf32>
    %cst_72 = arith.constant 0.000000e+00 : f32
    %546 = vector.broadcast %cst_72 : f32 to vector<1x32xf32>
    %547 = arith.maximumf %545, %546 : vector<1x32xf32>
    %548 = arith.mulf %547, %3 : vector<1x32xf32>
    %cst_73 = arith.constant dense<0.000000e+00> : vector<1xf32>
    %549 = vector.multi_reduction <add>, %548, %cst_73 [1] : vector<1x32xf32> to vector<1xf32>
    %550 = vector.shape_cast %549 : vector<1xf32> to vector<1x1xf32>
    %551 = arith.addf %550, %29 : vector<1x1xf32>
    %552 = arith.mulf %5, %533 : vector<1x1xf32>
    %553 = arith.mulf %7, %542 : vector<1x1xf32>
    %554 = arith.addf %552, %553 : vector<1x1xf32>
    %c0_74 = arith.constant 0 : index
    %555 = arith.index_cast %c10_i32 : i32 to index
    %556 = memref.load %arg0[%c0_74, %555] : memref<5x16xf32, #tpu.memory_space<smem>>
    %557 = vector.broadcast %556 : f32 to vector<1x1xf32>
    %558 = arith.addf %554, %557 : vector<1x1xf32>
    %559 = arith.mulf %9, %551 : vector<1x1xf32>
    %560 = arith.addf %558, %559 : vector<1x1xf32>
    %561 = arith.mulf %11, %533 : vector<1x1xf32>
    %562 = arith.mulf %13, %542 : vector<1x1xf32>
    %563 = arith.addf %561, %562 : vector<1x1xf32>
    %564 = arith.mulf %15, %551 : vector<1x1xf32>
    %565 = arith.addf %563, %564 : vector<1x1xf32>
    %c1_75 = arith.constant 1 : index
    %566 = arith.index_cast %c10_i32 : i32 to index
    %567 = memref.load %arg0[%c1_75, %566] : memref<5x16xf32, #tpu.memory_space<smem>>
    %568 = vector.broadcast %567 : f32 to vector<1x1xf32>
    %569 = arith.addf %565, %568 : vector<1x1xf32>
    %c4_76 = arith.constant 4 : index
    %570 = arith.index_cast %c10_i32 : i32 to index
    %571 = memref.load %arg0[%c4_76, %570] : memref<5x16xf32, #tpu.memory_space<smem>>
    %572 = vector.broadcast %571 : f32 to vector<1x1xf32>
    %573 = arith.subf %569, %572 : vector<1x1xf32>
    %574 = arith.mulf %573, %573 : vector<1x1xf32>
    %575 = arith.addf %524, %574 : vector<1x1xf32>
    %576 = arith.mulf %17, %533 : vector<1x1xf32>
    %577 = arith.mulf %19, %542 : vector<1x1xf32>
    %578 = arith.addf %576, %577 : vector<1x1xf32>
    %579 = arith.mulf %25, %551 : vector<1x1xf32>
    %580 = arith.addf %578, %579 : vector<1x1xf32>
    %c2_77 = arith.constant 2 : index
    %581 = arith.index_cast %c10_i32 : i32 to index
    %582 = memref.load %arg0[%c2_77, %581] : memref<5x16xf32, #tpu.memory_space<smem>>
    %583 = vector.broadcast %582 : f32 to vector<1x1xf32>
    %584 = arith.addf %580, %583 : vector<1x1xf32>
    %585 = arith.mulf %21, %533 : vector<1x1xf32>
    %586 = arith.mulf %23, %542 : vector<1x1xf32>
    %587 = arith.addf %585, %586 : vector<1x1xf32>
    %588 = arith.mulf %27, %551 : vector<1x1xf32>
    %589 = arith.addf %587, %588 : vector<1x1xf32>
    %c3_78 = arith.constant 3 : index
    %590 = arith.index_cast %c10_i32 : i32 to index
    %591 = memref.load %arg0[%c3_78, %590] : memref<5x16xf32, #tpu.memory_space<smem>>
    %592 = vector.broadcast %591 : f32 to vector<1x1xf32>
    %593 = arith.addf %589, %592 : vector<1x1xf32>
    %c11_i32 = arith.constant 11 : i32
    %594 = vector.broadcast %560 : vector<1x1xf32> to vector<1x32xf32>
    %595 = arith.mulf %594, %1 : vector<1x32xf32>
    %596 = arith.addf %595, %2 : vector<1x32xf32>
    %cst_79 = arith.constant 0.000000e+00 : f32
    %597 = vector.broadcast %cst_79 : f32 to vector<1x32xf32>
    %598 = arith.maximumf %596, %597 : vector<1x32xf32>
    %599 = arith.mulf %598, %3 : vector<1x32xf32>
    %cst_80 = arith.constant dense<0.000000e+00> : vector<1xf32>
    %600 = vector.multi_reduction <add>, %599, %cst_80 [1] : vector<1x32xf32> to vector<1xf32>
    %601 = vector.shape_cast %600 : vector<1xf32> to vector<1x1xf32>
    %602 = arith.addf %601, %29 : vector<1x1xf32>
    %603 = arith.mulf %5, %584 : vector<1x1xf32>
    %604 = arith.mulf %7, %593 : vector<1x1xf32>
    %605 = arith.addf %603, %604 : vector<1x1xf32>
    %c0_81 = arith.constant 0 : index
    %606 = arith.index_cast %c11_i32 : i32 to index
    %607 = memref.load %arg0[%c0_81, %606] : memref<5x16xf32, #tpu.memory_space<smem>>
    %608 = vector.broadcast %607 : f32 to vector<1x1xf32>
    %609 = arith.addf %605, %608 : vector<1x1xf32>
    %610 = arith.mulf %9, %602 : vector<1x1xf32>
    %611 = arith.addf %609, %610 : vector<1x1xf32>
    %612 = arith.mulf %11, %584 : vector<1x1xf32>
    %613 = arith.mulf %13, %593 : vector<1x1xf32>
    %614 = arith.addf %612, %613 : vector<1x1xf32>
    %615 = arith.mulf %15, %602 : vector<1x1xf32>
    %616 = arith.addf %614, %615 : vector<1x1xf32>
    %c1_82 = arith.constant 1 : index
    %617 = arith.index_cast %c11_i32 : i32 to index
    %618 = memref.load %arg0[%c1_82, %617] : memref<5x16xf32, #tpu.memory_space<smem>>
    %619 = vector.broadcast %618 : f32 to vector<1x1xf32>
    %620 = arith.addf %616, %619 : vector<1x1xf32>
    %c4_83 = arith.constant 4 : index
    %621 = arith.index_cast %c11_i32 : i32 to index
    %622 = memref.load %arg0[%c4_83, %621] : memref<5x16xf32, #tpu.memory_space<smem>>
    %623 = vector.broadcast %622 : f32 to vector<1x1xf32>
    %624 = arith.subf %620, %623 : vector<1x1xf32>
    %625 = arith.mulf %624, %624 : vector<1x1xf32>
    %626 = arith.addf %575, %625 : vector<1x1xf32>
    %627 = arith.mulf %17, %584 : vector<1x1xf32>
    %628 = arith.mulf %19, %593 : vector<1x1xf32>
    %629 = arith.addf %627, %628 : vector<1x1xf32>
    %630 = arith.mulf %25, %602 : vector<1x1xf32>
    %631 = arith.addf %629, %630 : vector<1x1xf32>
    %c2_84 = arith.constant 2 : index
    %632 = arith.index_cast %c11_i32 : i32 to index
    %633 = memref.load %arg0[%c2_84, %632] : memref<5x16xf32, #tpu.memory_space<smem>>
    %634 = vector.broadcast %633 : f32 to vector<1x1xf32>
    %635 = arith.addf %631, %634 : vector<1x1xf32>
    %636 = arith.mulf %21, %584 : vector<1x1xf32>
    %637 = arith.mulf %23, %593 : vector<1x1xf32>
    %638 = arith.addf %636, %637 : vector<1x1xf32>
    %639 = arith.mulf %27, %602 : vector<1x1xf32>
    %640 = arith.addf %638, %639 : vector<1x1xf32>
    %c3_85 = arith.constant 3 : index
    %641 = arith.index_cast %c11_i32 : i32 to index
    %642 = memref.load %arg0[%c3_85, %641] : memref<5x16xf32, #tpu.memory_space<smem>>
    %643 = vector.broadcast %642 : f32 to vector<1x1xf32>
    %644 = arith.addf %640, %643 : vector<1x1xf32>
    %c12_i32 = arith.constant 12 : i32
    %645 = vector.broadcast %611 : vector<1x1xf32> to vector<1x32xf32>
    %646 = arith.mulf %645, %1 : vector<1x32xf32>
    %647 = arith.addf %646, %2 : vector<1x32xf32>
    %cst_86 = arith.constant 0.000000e+00 : f32
    %648 = vector.broadcast %cst_86 : f32 to vector<1x32xf32>
    %649 = arith.maximumf %647, %648 : vector<1x32xf32>
    %650 = arith.mulf %649, %3 : vector<1x32xf32>
    %cst_87 = arith.constant dense<0.000000e+00> : vector<1xf32>
    %651 = vector.multi_reduction <add>, %650, %cst_87 [1] : vector<1x32xf32> to vector<1xf32>
    %652 = vector.shape_cast %651 : vector<1xf32> to vector<1x1xf32>
    %653 = arith.addf %652, %29 : vector<1x1xf32>
    %654 = arith.mulf %5, %635 : vector<1x1xf32>
    %655 = arith.mulf %7, %644 : vector<1x1xf32>
    %656 = arith.addf %654, %655 : vector<1x1xf32>
    %c0_88 = arith.constant 0 : index
    %657 = arith.index_cast %c12_i32 : i32 to index
    %658 = memref.load %arg0[%c0_88, %657] : memref<5x16xf32, #tpu.memory_space<smem>>
    %659 = vector.broadcast %658 : f32 to vector<1x1xf32>
    %660 = arith.addf %656, %659 : vector<1x1xf32>
    %661 = arith.mulf %9, %653 : vector<1x1xf32>
    %662 = arith.addf %660, %661 : vector<1x1xf32>
    %663 = arith.mulf %11, %635 : vector<1x1xf32>
    %664 = arith.mulf %13, %644 : vector<1x1xf32>
    %665 = arith.addf %663, %664 : vector<1x1xf32>
    %666 = arith.mulf %15, %653 : vector<1x1xf32>
    %667 = arith.addf %665, %666 : vector<1x1xf32>
    %c1_89 = arith.constant 1 : index
    %668 = arith.index_cast %c12_i32 : i32 to index
    %669 = memref.load %arg0[%c1_89, %668] : memref<5x16xf32, #tpu.memory_space<smem>>
    %670 = vector.broadcast %669 : f32 to vector<1x1xf32>
    %671 = arith.addf %667, %670 : vector<1x1xf32>
    %c4_90 = arith.constant 4 : index
    %672 = arith.index_cast %c12_i32 : i32 to index
    %673 = memref.load %arg0[%c4_90, %672] : memref<5x16xf32, #tpu.memory_space<smem>>
    %674 = vector.broadcast %673 : f32 to vector<1x1xf32>
    %675 = arith.subf %671, %674 : vector<1x1xf32>
    %676 = arith.mulf %675, %675 : vector<1x1xf32>
    %677 = arith.addf %626, %676 : vector<1x1xf32>
    %678 = arith.mulf %17, %635 : vector<1x1xf32>
    %679 = arith.mulf %19, %644 : vector<1x1xf32>
    %680 = arith.addf %678, %679 : vector<1x1xf32>
    %681 = arith.mulf %25, %653 : vector<1x1xf32>
    %682 = arith.addf %680, %681 : vector<1x1xf32>
    %c2_91 = arith.constant 2 : index
    %683 = arith.index_cast %c12_i32 : i32 to index
    %684 = memref.load %arg0[%c2_91, %683] : memref<5x16xf32, #tpu.memory_space<smem>>
    %685 = vector.broadcast %684 : f32 to vector<1x1xf32>
    %686 = arith.addf %682, %685 : vector<1x1xf32>
    %687 = arith.mulf %21, %635 : vector<1x1xf32>
    %688 = arith.mulf %23, %644 : vector<1x1xf32>
    %689 = arith.addf %687, %688 : vector<1x1xf32>
    %690 = arith.mulf %27, %653 : vector<1x1xf32>
    %691 = arith.addf %689, %690 : vector<1x1xf32>
    %c3_92 = arith.constant 3 : index
    %692 = arith.index_cast %c12_i32 : i32 to index
    %693 = memref.load %arg0[%c3_92, %692] : memref<5x16xf32, #tpu.memory_space<smem>>
    %694 = vector.broadcast %693 : f32 to vector<1x1xf32>
    %695 = arith.addf %691, %694 : vector<1x1xf32>
    %c13_i32 = arith.constant 13 : i32
    %696 = vector.broadcast %662 : vector<1x1xf32> to vector<1x32xf32>
    %697 = arith.mulf %696, %1 : vector<1x32xf32>
    %698 = arith.addf %697, %2 : vector<1x32xf32>
    %cst_93 = arith.constant 0.000000e+00 : f32
    %699 = vector.broadcast %cst_93 : f32 to vector<1x32xf32>
    %700 = arith.maximumf %698, %699 : vector<1x32xf32>
    %701 = arith.mulf %700, %3 : vector<1x32xf32>
    %cst_94 = arith.constant dense<0.000000e+00> : vector<1xf32>
    %702 = vector.multi_reduction <add>, %701, %cst_94 [1] : vector<1x32xf32> to vector<1xf32>
    %703 = vector.shape_cast %702 : vector<1xf32> to vector<1x1xf32>
    %704 = arith.addf %703, %29 : vector<1x1xf32>
    %705 = arith.mulf %5, %686 : vector<1x1xf32>
    %706 = arith.mulf %7, %695 : vector<1x1xf32>
    %707 = arith.addf %705, %706 : vector<1x1xf32>
    %c0_95 = arith.constant 0 : index
    %708 = arith.index_cast %c13_i32 : i32 to index
    %709 = memref.load %arg0[%c0_95, %708] : memref<5x16xf32, #tpu.memory_space<smem>>
    %710 = vector.broadcast %709 : f32 to vector<1x1xf32>
    %711 = arith.addf %707, %710 : vector<1x1xf32>
    %712 = arith.mulf %9, %704 : vector<1x1xf32>
    %713 = arith.addf %711, %712 : vector<1x1xf32>
    %714 = arith.mulf %11, %686 : vector<1x1xf32>
    %715 = arith.mulf %13, %695 : vector<1x1xf32>
    %716 = arith.addf %714, %715 : vector<1x1xf32>
    %717 = arith.mulf %15, %704 : vector<1x1xf32>
    %718 = arith.addf %716, %717 : vector<1x1xf32>
    %c1_96 = arith.constant 1 : index
    %719 = arith.index_cast %c13_i32 : i32 to index
    %720 = memref.load %arg0[%c1_96, %719] : memref<5x16xf32, #tpu.memory_space<smem>>
    %721 = vector.broadcast %720 : f32 to vector<1x1xf32>
    %722 = arith.addf %718, %721 : vector<1x1xf32>
    %c4_97 = arith.constant 4 : index
    %723 = arith.index_cast %c13_i32 : i32 to index
    %724 = memref.load %arg0[%c4_97, %723] : memref<5x16xf32, #tpu.memory_space<smem>>
    %725 = vector.broadcast %724 : f32 to vector<1x1xf32>
    %726 = arith.subf %722, %725 : vector<1x1xf32>
    %727 = arith.mulf %726, %726 : vector<1x1xf32>
    %728 = arith.addf %677, %727 : vector<1x1xf32>
    %729 = arith.mulf %17, %686 : vector<1x1xf32>
    %730 = arith.mulf %19, %695 : vector<1x1xf32>
    %731 = arith.addf %729, %730 : vector<1x1xf32>
    %732 = arith.mulf %25, %704 : vector<1x1xf32>
    %733 = arith.addf %731, %732 : vector<1x1xf32>
    %c2_98 = arith.constant 2 : index
    %734 = arith.index_cast %c13_i32 : i32 to index
    %735 = memref.load %arg0[%c2_98, %734] : memref<5x16xf32, #tpu.memory_space<smem>>
    %736 = vector.broadcast %735 : f32 to vector<1x1xf32>
    %737 = arith.addf %733, %736 : vector<1x1xf32>
    %738 = arith.mulf %21, %686 : vector<1x1xf32>
    %739 = arith.mulf %23, %695 : vector<1x1xf32>
    %740 = arith.addf %738, %739 : vector<1x1xf32>
    %741 = arith.mulf %27, %704 : vector<1x1xf32>
    %742 = arith.addf %740, %741 : vector<1x1xf32>
    %c3_99 = arith.constant 3 : index
    %743 = arith.index_cast %c13_i32 : i32 to index
    %744 = memref.load %arg0[%c3_99, %743] : memref<5x16xf32, #tpu.memory_space<smem>>
    %745 = vector.broadcast %744 : f32 to vector<1x1xf32>
    %746 = arith.addf %742, %745 : vector<1x1xf32>
    %c14_i32 = arith.constant 14 : i32
    %747 = vector.broadcast %713 : vector<1x1xf32> to vector<1x32xf32>
    %748 = arith.mulf %747, %1 : vector<1x32xf32>
    %749 = arith.addf %748, %2 : vector<1x32xf32>
    %cst_100 = arith.constant 0.000000e+00 : f32
    %750 = vector.broadcast %cst_100 : f32 to vector<1x32xf32>
    %751 = arith.maximumf %749, %750 : vector<1x32xf32>
    %752 = arith.mulf %751, %3 : vector<1x32xf32>
    %cst_101 = arith.constant dense<0.000000e+00> : vector<1xf32>
    %753 = vector.multi_reduction <add>, %752, %cst_101 [1] : vector<1x32xf32> to vector<1xf32>
    %754 = vector.shape_cast %753 : vector<1xf32> to vector<1x1xf32>
    %755 = arith.addf %754, %29 : vector<1x1xf32>
    %756 = arith.mulf %5, %737 : vector<1x1xf32>
    %757 = arith.mulf %7, %746 : vector<1x1xf32>
    %758 = arith.addf %756, %757 : vector<1x1xf32>
    %c0_102 = arith.constant 0 : index
    %759 = arith.index_cast %c14_i32 : i32 to index
    %760 = memref.load %arg0[%c0_102, %759] : memref<5x16xf32, #tpu.memory_space<smem>>
    %761 = vector.broadcast %760 : f32 to vector<1x1xf32>
    %762 = arith.addf %758, %761 : vector<1x1xf32>
    %763 = arith.mulf %9, %755 : vector<1x1xf32>
    %764 = arith.addf %762, %763 : vector<1x1xf32>
    %765 = arith.mulf %11, %737 : vector<1x1xf32>
    %766 = arith.mulf %13, %746 : vector<1x1xf32>
    %767 = arith.addf %765, %766 : vector<1x1xf32>
    %768 = arith.mulf %15, %755 : vector<1x1xf32>
    %769 = arith.addf %767, %768 : vector<1x1xf32>
    %c1_103 = arith.constant 1 : index
    %770 = arith.index_cast %c14_i32 : i32 to index
    %771 = memref.load %arg0[%c1_103, %770] : memref<5x16xf32, #tpu.memory_space<smem>>
    %772 = vector.broadcast %771 : f32 to vector<1x1xf32>
    %773 = arith.addf %769, %772 : vector<1x1xf32>
    %c4_104 = arith.constant 4 : index
    %774 = arith.index_cast %c14_i32 : i32 to index
    %775 = memref.load %arg0[%c4_104, %774] : memref<5x16xf32, #tpu.memory_space<smem>>
    %776 = vector.broadcast %775 : f32 to vector<1x1xf32>
    %777 = arith.subf %773, %776 : vector<1x1xf32>
    %778 = arith.mulf %777, %777 : vector<1x1xf32>
    %779 = arith.addf %728, %778 : vector<1x1xf32>
    %780 = arith.mulf %17, %737 : vector<1x1xf32>
    %781 = arith.mulf %19, %746 : vector<1x1xf32>
    %782 = arith.addf %780, %781 : vector<1x1xf32>
    %783 = arith.mulf %25, %755 : vector<1x1xf32>
    %784 = arith.addf %782, %783 : vector<1x1xf32>
    %c2_105 = arith.constant 2 : index
    %785 = arith.index_cast %c14_i32 : i32 to index
    %786 = memref.load %arg0[%c2_105, %785] : memref<5x16xf32, #tpu.memory_space<smem>>
    %787 = vector.broadcast %786 : f32 to vector<1x1xf32>
    %788 = arith.addf %784, %787 : vector<1x1xf32>
    %789 = arith.mulf %21, %737 : vector<1x1xf32>
    %790 = arith.mulf %23, %746 : vector<1x1xf32>
    %791 = arith.addf %789, %790 : vector<1x1xf32>
    %792 = arith.mulf %27, %755 : vector<1x1xf32>
    %793 = arith.addf %791, %792 : vector<1x1xf32>
    %c3_106 = arith.constant 3 : index
    %794 = arith.index_cast %c14_i32 : i32 to index
    %795 = memref.load %arg0[%c3_106, %794] : memref<5x16xf32, #tpu.memory_space<smem>>
    %796 = vector.broadcast %795 : f32 to vector<1x1xf32>
    %797 = arith.addf %793, %796 : vector<1x1xf32>
    %c15_i32 = arith.constant 15 : i32
    %798 = vector.broadcast %764 : vector<1x1xf32> to vector<1x32xf32>
    %799 = arith.mulf %798, %1 : vector<1x32xf32>
    %800 = arith.addf %799, %2 : vector<1x32xf32>
    %cst_107 = arith.constant 0.000000e+00 : f32
    %801 = vector.broadcast %cst_107 : f32 to vector<1x32xf32>
    %802 = arith.maximumf %800, %801 : vector<1x32xf32>
    %803 = arith.mulf %802, %3 : vector<1x32xf32>
    %cst_108 = arith.constant dense<0.000000e+00> : vector<1xf32>
    %804 = vector.multi_reduction <add>, %803, %cst_108 [1] : vector<1x32xf32> to vector<1xf32>
    %805 = vector.shape_cast %804 : vector<1xf32> to vector<1x1xf32>
    %806 = arith.addf %805, %29 : vector<1x1xf32>
    %807 = arith.mulf %5, %788 : vector<1x1xf32>
    %808 = arith.mulf %7, %797 : vector<1x1xf32>
    %809 = arith.addf %807, %808 : vector<1x1xf32>
    %c0_109 = arith.constant 0 : index
    %810 = arith.index_cast %c15_i32 : i32 to index
    %811 = memref.load %arg0[%c0_109, %810] : memref<5x16xf32, #tpu.memory_space<smem>>
    %812 = vector.broadcast %811 : f32 to vector<1x1xf32>
    %813 = arith.addf %809, %812 : vector<1x1xf32>
    %814 = arith.mulf %9, %806 : vector<1x1xf32>
    %815 = arith.addf %813, %814 : vector<1x1xf32>
    %816 = arith.mulf %11, %788 : vector<1x1xf32>
    %817 = arith.mulf %13, %797 : vector<1x1xf32>
    %818 = arith.addf %816, %817 : vector<1x1xf32>
    %819 = arith.mulf %15, %806 : vector<1x1xf32>
    %820 = arith.addf %818, %819 : vector<1x1xf32>
    %c1_110 = arith.constant 1 : index
    %821 = arith.index_cast %c15_i32 : i32 to index
    %822 = memref.load %arg0[%c1_110, %821] : memref<5x16xf32, #tpu.memory_space<smem>>
    %823 = vector.broadcast %822 : f32 to vector<1x1xf32>
    %824 = arith.addf %820, %823 : vector<1x1xf32>
    %c4_111 = arith.constant 4 : index
    %825 = arith.index_cast %c15_i32 : i32 to index
    %826 = memref.load %arg0[%c4_111, %825] : memref<5x16xf32, #tpu.memory_space<smem>>
    %827 = vector.broadcast %826 : f32 to vector<1x1xf32>
    %828 = arith.subf %824, %827 : vector<1x1xf32>
    %829 = arith.mulf %828, %828 : vector<1x1xf32>
    %830 = arith.addf %779, %829 : vector<1x1xf32>
    %831 = arith.mulf %17, %788 : vector<1x1xf32>
    %832 = arith.mulf %19, %797 : vector<1x1xf32>
    %833 = arith.addf %831, %832 : vector<1x1xf32>
    %834 = arith.mulf %25, %806 : vector<1x1xf32>
    %835 = arith.addf %833, %834 : vector<1x1xf32>
    %c2_112 = arith.constant 2 : index
    %836 = arith.index_cast %c15_i32 : i32 to index
    %837 = memref.load %arg0[%c2_112, %836] : memref<5x16xf32, #tpu.memory_space<smem>>
    %838 = vector.broadcast %837 : f32 to vector<1x1xf32>
    %839 = arith.addf %835, %838 : vector<1x1xf32>
    %840 = arith.mulf %21, %788 : vector<1x1xf32>
    %841 = arith.mulf %23, %797 : vector<1x1xf32>
    %842 = arith.addf %840, %841 : vector<1x1xf32>
    %843 = arith.mulf %27, %806 : vector<1x1xf32>
    %844 = arith.addf %842, %843 : vector<1x1xf32>
    %c3_113 = arith.constant 3 : index
    %845 = arith.index_cast %c15_i32 : i32 to index
    %846 = memref.load %arg0[%c3_113, %845] : memref<5x16xf32, #tpu.memory_space<smem>>
    %847 = vector.broadcast %846 : f32 to vector<1x1xf32>
    %848 = arith.addf %844, %847 : vector<1x1xf32>
    %c16_i32 = arith.constant 16 : i32
    %cst_114 = arith.constant 6.250000e-02 : f32
    %849 = vector.broadcast %cst_114 : f32 to vector<1x1xf32>
    %850 = arith.mulf %830, %849 : vector<1x1xf32>
    %c0_115 = arith.constant 0 : index
    %c0_116 = arith.constant 0 : index
    %851 = vector.load %arg3[%c0_115, %c0_116] : memref<1x1xf32, #tpu.memory_space<vmem>>, vector<1x1xf32>
    tpu.vector_store %arg3[%c0_115, %c0_116], %850 {strides = array<i32>} : memref<1x1xf32, #tpu.memory_space<vmem>>, vector<1x1xf32>,
    return
  }
}

</mosaic_0001>

<llo_original>
// kernel: model_closure_loss.1
$region0: #{model_closure_loss.1}
  #allocation0 [shape = 'u32[]', space=smem, size = 0x4, offset = 0x4, fixed_abs, tag = 'smem constant byte address 0x4 - core index']
  #allocation1 [shape = 'u32[144,128]{1,0:T(1,128)}', space=vmem, size = 0x12000, scoped, tag = 'internal scratch']
  %s0 = inlined_call_operand.vmem [shape: f32[5,16], index: 0, kind: input, shape index: {}]
  %s1 = inlined_call_operand.vmem [shape: f32[14], index: 1, kind: input, shape index: {}]
  %s2 = inlined_call_operand.vmem [shape: f32[3,32], index: 2, kind: input, shape index: {}]
  %s3 = inlined_call_operand.hbm [shape: f32[1,1], index: 3, kind: output, shape index: {}]
  %s4 = sld [smem:[#allocation0]]
  $region30: #{model_closure_loss.1} parent=0
    _
  %s6 = ssub.s32 1, %s4
  %s7 = scalar_select 0, %s6, %s4
  $region1: #{model_closure_loss.1} parent=0
    #allocation2 [shape = 'u8[4096]{0}', space=smem, size = 0x1000, scoped, tag = 'input window, operand 0, single buffered']
    #allocation3 [shape = 's32[1]{0}', space=sflag, size = 0x4, scoped, tag = 'scoped memory for model_closure_loss.1']
    #allocation4 [shape = 's32[1]{0}', space=sflag, size = 0x4, scoped, tag = 'scoped memory for model_closure_loss.1']
    #allocation5 [shape = 'u8[512]{0}', space=smem, size = 0x200, scoped, tag = 'input window, operand 1, single buffered']
    #allocation6 [shape = 's32[1]{0}', space=sflag, size = 0x4, scoped, tag = 'scoped memory for model_closure_loss.1']
    #allocation7 [shape = 'u8[512]{0}', space=vmem, size = 0x400, scoped, tag = 'output window, operand 0, single buffered']
    %8 = vsyncpa [#allocation4], 0
    %9 = vsyncpa [#allocation6], 0
    %10 = vsyncpa [#allocation3], 0
    // Predicated region
    $region2: #{model_closure_loss.1} parent=1 // pred_check
      _
    $region3: #{model_closure_loss.1} parent=1 // pred_check_branch
      %12 = sbr.rel (0) target = $region5
    $region4: #{model_closure_loss.1} parent=1 // pred_region
      %s14 = ssub.s32 128, 128
      %15 = vsyncadd [#allocation4], %s14
      %s17 = sshll.u32 %s0, 4
      %s18 = int_to_ptr.vmem [resolvable:$true] %s17
      %20 = dma.vmem_to_smem %s18, 128, [#allocation2], [#allocation4]
    $region5: #{model_closure_loss.1} parent=1 // pred_fallthru
      _
    // Predicated region
    $region6: #{model_closure_loss.1} parent=1 // pred_check
      _
    $region7: #{model_closure_loss.1} parent=1 // pred_check_branch
      %22 = sbr.rel (0) target = $region9
    $region8: #{model_closure_loss.1} parent=1 // pred_region
      %s24 = ssub.s32 16, 16
      %25 = vsyncadd [#allocation6], %s24
      %s27 = sshll.u32 %s1, 4
      %s28 = int_to_ptr.vmem [resolvable:$true] %s27
      %30 = dma.vmem_to_smem %s28, 16, [#allocation5], [#allocation6]
    $region9: #{model_closure_loss.1} parent=1 // pred_fallthru
      _
    // Predicated region
    $region10: #{model_closure_loss.1} parent=1 // pred_check
      _
    $region11: #{model_closure_loss.1} parent=1 // pred_check_branch
      %32 = sbr.rel (0) target = $region13
    $region12: #{model_closure_loss.1} parent=1 // pred_region
      _
    $region13: #{model_closure_loss.1} parent=1 // pred_fallthru
      _
    // Predicated region
    $region14: #{model_closure_loss.1} parent=1 // pred_check
      _
    $region15: #{model_closure_loss.1} parent=1 // pred_check_branch
      %34 = sbr.rel (0) target = $region17
    $region16: #{model_closure_loss.1} parent=1 // pred_region
      %35 = dma.done [#allocation4], 128
    $region17: #{model_closure_loss.1} parent=1 // pred_fallthru
      _
    // Predicated region
    $region18: #{model_closure_loss.1} parent=1 // pred_check
      _
    $region19: #{model_closure_loss.1} parent=1 // pred_check_branch
      %37 = sbr.rel (0) target = $region21
    $region20: #{model_closure_loss.1} parent=1 // pred_region
      %38 = dma.done [#allocation6], 16
    $region21: #{model_closure_loss.1} parent=1 // pred_fallthru
      _
    %39 = sfence
    %v40 = vld [vmem:[%s2] sm:$0x7]
    %s41 = sld [smem:[#allocation5]]
    %v42 = vstv %s41
    %s43 = sld [smem:[#allocation5 + $0x1]]
    %v44 = vstv %s43
    %s45 = sld [smem:[#allocation5 + $0x2]]
    %v46 = vstv %s45
    %s47 = sld [smem:[#allocation5 + $0x3]]
    %v48 = vstv %s47
    %s49 = sld [smem:[#allocation5 + $0x4]]
    %v50 = vstv %s49
    %s51 = sld [smem:[#allocation5 + $0x5]]
    %v52 = vstv %s51
    %s53 = sld [smem:[#allocation5 + $0x6]]
    %v54 = vstv %s53
    %s55 = sld [smem:[#allocation5 + $0x7]]
    %v56 = vstv %s55
    %s57 = sld [smem:[#allocation5 + $0x8]]
    %v58 = vstv %s57
    %s59 = sld [smem:[#allocation5 + $0x9]]
    %v60 = vstv %s59
    %s61 = sld [smem:[#allocation5 + $0xa]]
    %v62 = vstv %s61
    %s63 = sld [smem:[#allocation5 + $0xb]]
    %v64 = vstv %s63
    %s65 = sld [smem:[#allocation5 + $0xc]]
    %v66 = vstv %s65
    %s67 = sld [smem:[#allocation5 + $0xd]]
    %v68 = vstv %s67
    %v69 = vmul.f32 %v68, %v40
    %v71 = vrot.slane %v40, 1
    %v73 = vadd.f32 %v69, %v71
    %v74 = vmax.f32 %v73, 0.0
    %v75 = vrot.slane %v40, 2
    %v77 = vmul.f32 %v74, %v75
    %vm78 = vcmask 253952
    %v79 = vsel %vm78, %v77, 0.0
    %80 = vadd.xlane.f32.xlu0 %v79
    %v81 = vpop.xlane.xlu0 %80
    %v82 = vadd.f32 %v81, %v66
    %v83 = vmul.f32 %v42, 0.0
    %v84 = vmul.f32 %v44, 0.0
    %v85 = vadd.f32 %v83, %v84
    %s86 = sld [smem:[#allocation2]]
    %v87 = vstv %s86
    %v88 = vadd.f32 %v85, %v87
    %v89 = vmul.f32 %v46, %v82
    %v90 = vadd.f32 %v88, %v89
    %v91 = vmul.f32 %v48, 0.0
    %v92 = vmul.f32 %v50, 0.0
    %v93 = vadd.f32 %v91, %v92
    %v94 = vmul.f32 %v52, %v82
    %v95 = vadd.f32 %v93, %v94
    %s96 = sld [smem:[#allocation2 + $0x80]]
    %v97 = vstv %s96
    %v98 = vadd.f32 %v95, %v97
    %s99 = sld [smem:[#allocation2 + $0x200]]
    %v100 = vstv %s99
    %v101 = vsub.f32 %v98, %v100
    %v102 = vmul.f32 %v101, %v101
    %v103 = vadd.f32 %v102, 0.0
    %v104 = vmul.f32 %v54, 0.0
    %v105 = vmul.f32 %v56, 0.0
    %v106 = vadd.f32 %v104, %v105
    %v107 = vmul.f32 %v62, %v82
    %v108 = vadd.f32 %v106, %v107
    %s109 = sld [smem:[#allocation2 + $0x100]]
    %v110 = vstv %s109
    %v111 = vadd.f32 %v108, %v110
    %v112 = vmul.f32 %v58, 0.0
    %v113 = vmul.f32 %v60, 0.0
    %v114 = vadd.f32 %v112, %v113
    %v115 = vmul.f32 %v64, %v82
    %v116 = vadd.f32 %v114, %v115
    %s117 = sld [smem:[#allocation2 + $0x180]]
    %v118 = vstv %s117
    %v119 = vadd.f32 %v116, %v118
    %v120 = vmul.f32 %v90, %v40
    %v121 = vadd.f32 %v120, %v71
    %v122 = vmax.f32 %v121, 0.0
    %v123 = vmul.f32 %v122, %v75
    %v124 = vsel %vm78, %v123, 0.0
    %125 = vadd.xlane.f32.xlu0 %v124
    %v126 = vpop.xlane.xlu0 %125
    %v127 = vadd.f32 %v126, %v66
    %v128 = vmul.f32 %v42, %v111
    %v129 = vmul.f32 %v44, %v119
    %v130 = vadd.f32 %v128, %v129
    %s131 = sld [smem:[#allocation2 + $0x1]]
    %v132 = vstv %s131
    %v133 = vadd.f32 %v130, %v132
    %v134 = vmul.f32 %v46, %v127
    %v135 = vadd.f32 %v133, %v134
    %v136 = vmul.f32 %v48, %v111
    %v137 = vmul.f32 %v50, %v119
    %v138 = vadd.f32 %v136, %v137
    %v139 = vmul.f32 %v52, %v127
    %v140 = vadd.f32 %v138, %v139
    %s141 = sld [smem:[#allocation2 + $0x81]]
    %v142 = vstv %s141
    %v143 = vadd.f32 %v140, %v142
    %s144 = sld [smem:[#allocation2 + $0x201]]
    %v145 = vstv %s144
    %v146 = vsub.f32 %v143, %v145
    %v147 = vmul.f32 %v146, %v146
    %v148 = vadd.f32 %v103, %v147
    %v149 = vmul.f32 %v54, %v111
    %v150 = vmul.f32 %v56, %v119
    %v151 = vadd.f32 %v149, %v150
    %v152 = vmul.f32 %v62, %v127
    %v153 = vadd.f32 %v151, %v152
    %s154 = sld [smem:[#allocation2 + $0x101]]
    %v155 = vstv %s154
    %v156 = vadd.f32 %v153, %v155
    %v157 = vmul.f32 %v58, %v111
    %v158 = vmul.f32 %v60, %v119
    %v159 = vadd.f32 %v157, %v158
    %v160 = vmul.f32 %v64, %v127
    %v161 = vadd.f32 %v159, %v160
    %s162 = sld [smem:[#allocation2 + $0x181]]
    %v163 = vstv %s162
    %v164 = vadd.f32 %v161, %v163
    %v165 = vmul.f32 %v135, %v40
    %v166 = vadd.f32 %v165, %v71
    %v167 = vmax.f32 %v166, 0.0
    %v168 = vmul.f32 %v167, %v75
    %v169 = vsel %vm78, %v168, 0.0
    %170 = vadd.xlane.f32.xlu0 %v169
    %v171 = vpop.xlane.xlu0 %170
    %v172 = vadd.f32 %v171, %v66
    %v173 = vmul.f32 %v42, %v156
    %v174 = vmul.f32 %v44, %v164
    %v175 = vadd.f32 %v173, %v174
    %s176 = sld [smem:[#allocation2 + $0x2]]
    %v177 = vstv %s176
    %v178 = vadd.f32 %v175, %v177
    %v179 = vmul.f32 %v46, %v172
    %v180 = vadd.f32 %v178, %v179
    %v181 = vmul.f32 %v48, %v156
    %v182 = vmul.f32 %v50, %v164
    %v183 = vadd.f32 %v181, %v182
    %v184 = vmul.f32 %v52, %v172
    %v185 = vadd.f32 %v183, %v184
    %s186 = sld [smem:[#allocation2 + $0x82]]
    %v187 = vstv %s186
    %v188 = vadd.f32 %v185, %v187
    %s189 = sld [smem:[#allocation2 + $0x202]]
    %v190 = vstv %s189
    %v191 = vsub.f32 %v188, %v190
    %v192 = vmul.f32 %v191, %v191
    %v193 = vadd.f32 %v148, %v192
    %v194 = vmul.f32 %v54, %v156
    %v195 = vmul.f32 %v56, %v164
    %v196 = vadd.f32 %v194, %v195
    %v197 = vmul.f32 %v62, %v172
    %v198 = vadd.f32 %v196, %v197
    %s199 = sld [smem:[#allocation2 + $0x102]]
    %v200 = vstv %s199
    %v201 = vadd.f32 %v198, %v200
    %v202 = vmul.f32 %v58, %v156
    %v203 = vmul.f32 %v60, %v164
    %v204 = vadd.f32 %v202, %v203
    %v205 = vmul.f32 %v64, %v172
    %v206 = vadd.f32 %v204, %v205
    %s207 = sld [smem:[#allocation2 + $0x182]]
    %v208 = vstv %s207
    %v209 = vadd.f32 %v206, %v208
    %v210 = vmul.f32 %v180, %v40
    %v211 = vadd.f32 %v210, %v71
    %v212 = vmax.f32 %v211, 0.0
    %v213 = vmul.f32 %v212, %v75
    %v214 = vsel %vm78, %v213, 0.0
    %215 = vadd.xlane.f32.xlu0 %v214
    %v216 = vpop.xlane.xlu0 %215
    %v217 = vadd.f32 %v216, %v66
    %v218 = vmul.f32 %v42, %v201
    %v219 = vmul.f32 %v44, %v209
    %v220 = vadd.f32 %v218, %v219
    %s221 = sld [smem:[#allocation2 + $0x3]]
    %v222 = vstv %s221
    %v223 = vadd.f32 %v220, %v222
    %v224 = vmul.f32 %v46, %v217
    %v225 = vadd.f32 %v223, %v224
    %v226 = vmul.f32 %v48, %v201
    %v227 = vmul.f32 %v50, %v209
    %v228 = vadd.f32 %v226, %v227
    %v229 = vmul.f32 %v52, %v217
    %v230 = vadd.f32 %v228, %v229
    %s231 = sld [smem:[#allocation2 + $0x83]]
    %v232 = vstv %s231
    %v233 = vadd.f32 %v230, %v232
    %s234 = sld [smem:[#allocation2 + $0x203]]
    %v235 = vstv %s234
    %v236 = vsub.f32 %v233, %v235
    %v237 = vmul.f32 %v236, %v236
    %v238 = vadd.f32 %v193, %v237
    %v239 = vmul.f32 %v54, %v201
    %v240 = vmul.f32 %v56, %v209
    %v241 = vadd.f32 %v239, %v240
    %v242 = vmul.f32 %v62, %v217
    %v243 = vadd.f32 %v241, %v242
    %s244 = sld [smem:[#allocation2 + $0x103]]
    %v245 = vstv %s244
    %v246 = vadd.f32 %v243, %v245
    %v247 = vmul.f32 %v58, %v201
    %v248 = vmul.f32 %v60, %v209
    %v249 = vadd.f32 %v247, %v248
    %v250 = vmul.f32 %v64, %v217
    %v251 = vadd.f32 %v249, %v250
    %s252 = sld [smem:[#allocation2 + $0x183]]
    %v253 = vstv %s252
    %v254 = vadd.f32 %v251, %v253
    %v255 = vmul.f32 %v225, %v40
    %v256 = vadd.f32 %v255, %v71
    %v257 = vmax.f32 %v256, 0.0
    %v258 = vmul.f32 %v257, %v75
    %v259 = vsel %vm78, %v258, 0.0
    %260 = vadd.xlane.f32.xlu0 %v259
    %v261 = vpop.xlane.xlu0 %260
    %v262 = vadd.f32 %v261, %v66
    %v263 = vmul.f32 %v42, %v246
    %v264 = vmul.f32 %v44, %v254
    %v265 = vadd.f32 %v263, %v264
    %s266 = sld [smem:[#allocation2 + $0x4]]
    %v267 = vstv %s266
    %v268 = vadd.f32 %v265, %v267
    %v269 = vmul.f32 %v46, %v262
    %v270 = vadd.f32 %v268, %v269
    %v271 = vmul.f32 %v48, %v246
    %v272 = vmul.f32 %v50, %v254
    %v273 = vadd.f32 %v271, %v272
    %v274 = vmul.f32 %v52, %v262
    %v275 = vadd.f32 %v273, %v274
    %s276 = sld [smem:[#allocation2 + $0x84]]
    %v277 = vstv %s276
    %v278 = vadd.f32 %v275, %v277
    %s279 = sld [smem:[#allocation2 + $0x204]]
    %v280 = vstv %s279
    %v281 = vsub.f32 %v278, %v280
    %v282 = vmul.f32 %v281, %v281
    %v283 = vadd.f32 %v238, %v282
    %v284 = vmul.f32 %v54, %v246
    %v285 = vmul.f32 %v56, %v254
    %v286 = vadd.f32 %v284, %v285
    %v287 = vmul.f32 %v62, %v262
    %v288 = vadd.f32 %v286, %v287
    %s289 = sld [smem:[#allocation2 + $0x104]]
    %v290 = vstv %s289
    %v291 = vadd.f32 %v288, %v290
    %v292 = vmul.f32 %v58, %v246
    %v293 = vmul.f32 %v60, %v254
    %v294 = vadd.f32 %v292, %v293
    %v295 = vmul.f32 %v64, %v262
    %v296 = vadd.f32 %v294, %v295
    %s297 = sld [smem:[#allocation2 + $0x184]]
    %v298 = vstv %s297
    %v299 = vadd.f32 %v296, %v298
    %v300 = vmul.f32 %v270, %v40
    %v301 = vadd.f32 %v300, %v71
    %v302 = vmax.f32 %v301, 0.0
    %v303 = vmul.f32 %v302, %v75
    %v304 = vsel %vm78, %v303, 0.0
    %305 = vadd.xlane.f32.xlu0 %v304
    %v306 = vpop.xlane.xlu0 %305
    %v307 = vadd.f32 %v306, %v66
    %v308 = vmul.f32 %v42, %v291
    %v309 = vmul.f32 %v44, %v299
    %v310 = vadd.f32 %v308, %v309
    %s311 = sld [smem:[#allocation2 + $0x5]]
    %v312 = vstv %s311
    %v313 = vadd.f32 %v310, %v312
    %v314 = vmul.f32 %v46, %v307
    %v315 = vadd.f32 %v313, %v314
    %v316 = vmul.f32 %v48, %v291
    %v317 = vmul.f32 %v50, %v299
    %v318 = vadd.f32 %v316, %v317
    %v319 = vmul.f32 %v52, %v307
    %v320 = vadd.f32 %v318, %v319
    %s321 = sld [smem:[#allocation2 + $0x85]]
    %v322 = vstv %s321
    %v323 = vadd.f32 %v320, %v322
    %s324 = sld [smem:[#allocation2 + $0x205]]
    %v325 = vstv %s324
    %v326 = vsub.f32 %v323, %v325
    %v327 = vmul.f32 %v326, %v326
    %v328 = vadd.f32 %v283, %v327
    %v329 = vmul.f32 %v54, %v291
    %v330 = vmul.f32 %v56, %v299
    %v331 = vadd.f32 %v329, %v330
    %v332 = vmul.f32 %v62, %v307
    %v333 = vadd.f32 %v331, %v332
    %s334 = sld [smem:[#allocation2 + $0x105]]
    %v335 = vstv %s334
    %v336 = vadd.f32 %v333, %v335
    %v337 = vmul.f32 %v58, %v291
    %v338 = vmul.f32 %v60, %v299
    %v339 = vadd.f32 %v337, %v338
    %v340 = vmul.f32 %v64, %v307
    %v341 = vadd.f32 %v339, %v340
    %s342 = sld [smem:[#allocation2 + $0x185]]
    %v343 = vstv %s342
    %v344 = vadd.f32 %v341, %v343
    %v345 = vmul.f32 %v315, %v40
    %v346 = vadd.f32 %v345, %v71
    %v347 = vmax.f32 %v346, 0.0
    %v348 = vmul.f32 %v347, %v75
    %v349 = vsel %vm78, %v348, 0.0
    %350 = vadd.xlane.f32.xlu0 %v349
    %v351 = vpop.xlane.xlu0 %350
    %v352 = vadd.f32 %v351, %v66
    %v353 = vmul.f32 %v42, %v336
    %v354 = vmul.f32 %v44, %v344
    %v355 = vadd.f32 %v353, %v354
    %s356 = sld [smem:[#allocation2 + $0x6]]
    %v357 = vstv %s356
    %v358 = vadd.f32 %v355, %v357
    %v359 = vmul.f32 %v46, %v352
    %v360 = vadd.f32 %v358, %v359
    %v361 = vmul.f32 %v48, %v336
    %v362 = vmul.f32 %v50, %v344
    %v363 = vadd.f32 %v361, %v362
    %v364 = vmul.f32 %v52, %v352
    %v365 = vadd.f32 %v363, %v364
    %s366 = sld [smem:[#allocation2 + $0x86]]
    %v367 = vstv %s366
    %v368 = vadd.f32 %v365, %v367
    %s369 = sld [smem:[#allocation2 + $0x206]]
    %v370 = vstv %s369
    %v371 = vsub.f32 %v368, %v370
    %v372 = vmul.f32 %v371, %v371
    %v373 = vadd.f32 %v328, %v372
    %v374 = vmul.f32 %v54, %v336
    %v375 = vmul.f32 %v56, %v344
    %v376 = vadd.f32 %v374, %v375
    %v377 = vmul.f32 %v62, %v352
    %v378 = vadd.f32 %v376, %v377
    %s379 = sld [smem:[#allocation2 + $0x106]]
    %v380 = vstv %s379
    %v381 = vadd.f32 %v378, %v380
    %v382 = vmul.f32 %v58, %v336
    %v383 = vmul.f32 %v60, %v344
    %v384 = vadd.f32 %v382, %v383
    %v385 = vmul.f32 %v64, %v352
    %v386 = vadd.f32 %v384, %v385
    %s387 = sld [smem:[#allocation2 + $0x186]]
    %v388 = vstv %s387
    %v389 = vadd.f32 %v386, %v388
    %v390 = vmul.f32 %v360, %v40
    %v391 = vadd.f32 %v390, %v71
    %v392 = vmax.f32 %v391, 0.0
    %v393 = vmul.f32 %v392, %v75
    %v394 = vsel %vm78, %v393, 0.0
    %395 = vadd.xlane.f32.xlu0 %v394
    %v396 = vpop.xlane.xlu0 %395
    %v397 = vadd.f32 %v396, %v66
    %v398 = vmul.f32 %v42, %v381
    %v399 = vmul.f32 %v44, %v389
    %v400 = vadd.f32 %v398, %v399
    %s401 = sld [smem:[#allocation2 + $0x7]]
    %v402 = vstv %s401
    %v403 = vadd.f32 %v400, %v402
    %v404 = vmul.f32 %v46, %v397
    %v405 = vadd.f32 %v403, %v404
    %v406 = vmul.f32 %v48, %v381
    %v407 = vmul.f32 %v50, %v389
    %v408 = vadd.f32 %v406, %v407
    %v409 = vmul.f32 %v52, %v397
    %v410 = vadd.f32 %v408, %v409
    %s411 = sld [smem:[#allocation2 + $0x87]]
    %v412 = vstv %s411
    %v413 = vadd.f32 %v410, %v412
    %s414 = sld [smem:[#allocation2 + $0x207]]
    %v415 = vstv %s414
    %v416 = vsub.f32 %v413, %v415
    %v417 = vmul.f32 %v416, %v416
    %v418 = vadd.f32 %v373, %v417
    %v419 = vmul.f32 %v54, %v381
    %v420 = vmul.f32 %v56, %v389
    %v421 = vadd.f32 %v419, %v420
    %v422 = vmul.f32 %v62, %v397
    %v423 = vadd.f32 %v421, %v422
    %s424 = sld [smem:[#allocation2 + $0x107]]
    %v425 = vstv %s424
    %v426 = vadd.f32 %v423, %v425
    %v427 = vmul.f32 %v58, %v381
    %v428 = vmul.f32 %v60, %v389
    %v429 = vadd.f32 %v427, %v428
    %v430 = vmul.f32 %v64, %v397
    %v431 = vadd.f32 %v429, %v430
    %s432 = sld [smem:[#allocation2 + $0x187]]
    %v433 = vstv %s432
    %v434 = vadd.f32 %v431, %v433
    %v435 = vmul.f32 %v405, %v40
    %v436 = vadd.f32 %v435, %v71
    %v437 = vmax.f32 %v436, 0.0
    %v438 = vmul.f32 %v437, %v75
    %v439 = vsel %vm78, %v438, 0.0
    %440 = vadd.xlane.f32.xlu0 %v439
    %v441 = vpop.xlane.xlu0 %440
    %v442 = vadd.f32 %v441, %v66
    %v443 = vmul.f32 %v42, %v426
    %v444 = vmul.f32 %v44, %v434
    %v445 = vadd.f32 %v443, %v444
    %s446 = sld [smem:[#allocation2 + $0x8]]
    %v447 = vstv %s446
    %v448 = vadd.f32 %v445, %v447
    %v449 = vmul.f32 %v46, %v442
    %v450 = vadd.f32 %v448, %v449
    %v451 = vmul.f32 %v48, %v426
    %v452 = vmul.f32 %v50, %v434
    %v453 = vadd.f32 %v451, %v452
    %v454 = vmul.f32 %v52, %v442
    %v455 = vadd.f32 %v453, %v454
    %s456 = sld [smem:[#allocation2 + $0x88]]
    %v457 = vstv %s456
    %v458 = vadd.f32 %v455, %v457
    %s459 = sld [smem:[#allocation2 + $0x208]]
    %v460 = vstv %s459
    %v461 = vsub.f32 %v458, %v460
    %v462 = vmul.f32 %v461, %v461
    %v463 = vadd.f32 %v418, %v462
    %v464 = vmul.f32 %v54, %v426
    %v465 = vmul.f32 %v56, %v434
    %v466 = vadd.f32 %v464, %v465
    %v467 = vmul.f32 %v62, %v442
    %v468 = vadd.f32 %v466, %v467
    %s469 = sld [smem:[#allocation2 + $0x108]]
    %v470 = vstv %s469
    %v471 = vadd.f32 %v468, %v470
    %v472 = vmul.f32 %v58, %v426
    %v473 = vmul.f32 %v60, %v434
    %v474 = vadd.f32 %v472, %v473
    %v475 = vmul.f32 %v64, %v442
    %v476 = vadd.f32 %v474, %v475
    %s477 = sld [smem:[#allocation2 + $0x188]]
    %v478 = vstv %s477
    %v479 = vadd.f32 %v476, %v478
    %v480 = vmul.f32 %v450, %v40
    %v481 = vadd.f32 %v480, %v71
    %v482 = vmax.f32 %v481, 0.0
    %v483 = vmul.f32 %v482, %v75
    %v484 = vsel %vm78, %v483, 0.0
    %485 = vadd.xlane.f32.xlu0 %v484
    %v486 = vpop.xlane.xlu0 %485
    %v487 = vadd.f32 %v486, %v66
    %v488 = vmul.f32 %v42, %v471
    %v489 = vmul.f32 %v44, %v479
    %v490 = vadd.f32 %v488, %v489
    %s491 = sld [smem:[#allocation2 + $0x9]]
    %v492 = vstv %s491
    %v493 = vadd.f32 %v490, %v492
    %v494 = vmul.f32 %v46, %v487
    %v495 = vadd.f32 %v493, %v494
    %v496 = vmul.f32 %v48, %v471
    %v497 = vmul.f32 %v50, %v479
    %v498 = vadd.f32 %v496, %v497
    %v499 = vmul.f32 %v52, %v487
    %v500 = vadd.f32 %v498, %v499
    %s501 = sld [smem:[#allocation2 + $0x89]]
    %v502 = vstv %s501
    %v503 = vadd.f32 %v500, %v502
    %s504 = sld [smem:[#allocation2 + $0x209]]
    %v505 = vstv %s504
    %v506 = vsub.f32 %v503, %v505
    %v507 = vmul.f32 %v506, %v506
    %v508 = vadd.f32 %v463, %v507
    %v509 = vmul.f32 %v54, %v471
    %v510 = vmul.f32 %v56, %v479
    %v511 = vadd.f32 %v509, %v510
    %v512 = vmul.f32 %v62, %v487
    %v513 = vadd.f32 %v511, %v512
    %s514 = sld [smem:[#allocation2 + $0x109]]
    %v515 = vstv %s514
    %v516 = vadd.f32 %v513, %v515
    %v517 = vmul.f32 %v58, %v471
    %v518 = vmul.f32 %v60, %v479
    %v519 = vadd.f32 %v517, %v518
    %v520 = vmul.f32 %v64, %v487
    %v521 = vadd.f32 %v519, %v520
    %s522 = sld [smem:[#allocation2 + $0x189]]
    %v523 = vstv %s522
    %v524 = vadd.f32 %v521, %v523
    %v525 = vmul.f32 %v495, %v40
    %v526 = vadd.f32 %v525, %v71
    %v527 = vmax.f32 %v526, 0.0
    %v528 = vmul.f32 %v527, %v75
    %v529 = vsel %vm78, %v528, 0.0
    %530 = vadd.xlane.f32.xlu0 %v529
    %v531 = vpop.xlane.xlu0 %530
    %v532 = vadd.f32 %v531, %v66
    %v533 = vmul.f32 %v42, %v516
    %v534 = vmul.f32 %v44, %v524
    %v535 = vadd.f32 %v533, %v534
    %s536 = sld [smem:[#allocation2 + $0xa]]
    %v537 = vstv %s536
    %v538 = vadd.f32 %v535, %v537
    %v539 = vmul.f32 %v46, %v532
    %v540 = vadd.f32 %v538, %v539
    %v541 = vmul.f32 %v48, %v516
    %v542 = vmul.f32 %v50, %v524
    %v543 = vadd.f32 %v541, %v542
    %v544 = vmul.f32 %v52, %v532
    %v545 = vadd.f32 %v543, %v544
    %s546 = sld [smem:[#allocation2 + $0x8a]]
    %v547 = vstv %s546
    %v548 = vadd.f32 %v545, %v547
    %s549 = sld [smem:[#allocation2 + $0x20a]]
    %v550 = vstv %s549
    %v551 = vsub.f32 %v548, %v550
    %v552 = vmul.f32 %v551, %v551
    %v553 = vadd.f32 %v508, %v552
    %v554 = vmul.f32 %v54, %v516
    %v555 = vmul.f32 %v56, %v524
    %v556 = vadd.f32 %v554, %v555
    %v557 = vmul.f32 %v62, %v532
    %v558 = vadd.f32 %v556, %v557
    %s559 = sld [smem:[#allocation2 + $0x10a]]
    %v560 = vstv %s559
    %v561 = vadd.f32 %v558, %v560
    %v562 = vmul.f32 %v58, %v516
    %v563 = vmul.f32 %v60, %v524
    %v564 = vadd.f32 %v562, %v563
    %v565 = vmul.f32 %v64, %v532
    %v566 = vadd.f32 %v564, %v565
    %s567 = sld [smem:[#allocation2 + $0x18a]]
    %v568 = vstv %s567
    %v569 = vadd.f32 %v566, %v568
    %v570 = vmul.f32 %v540, %v40
    %v571 = vadd.f32 %v570, %v71
    %v572 = vmax.f32 %v571, 0.0
    %v573 = vmul.f32 %v572, %v75
    %v574 = vsel %vm78, %v573, 0.0
    %575 = vadd.xlane.f32.xlu0 %v574
    %v576 = vpop.xlane.xlu0 %575
    %v577 = vadd.f32 %v576, %v66
    %v578 = vmul.f32 %v42, %v561
    %v579 = vmul.f32 %v44, %v569
    %v580 = vadd.f32 %v578, %v579
    %s581 = sld [smem:[#allocation2 + $0xb]]
    %v582 = vstv %s581
    %v583 = vadd.f32 %v580, %v582
    %v584 = vmul.f32 %v46, %v577
    %v585 = vadd.f32 %v583, %v584
    %v586 = vmul.f32 %v48, %v561
    %v587 = vmul.f32 %v50, %v569
    %v588 = vadd.f32 %v586, %v587
    %v589 = vmul.f32 %v52, %v577
    %v590 = vadd.f32 %v588, %v589
    %s591 = sld [smem:[#allocation2 + $0x8b]]
    %v592 = vstv %s591
    %v593 = vadd.f32 %v590, %v592
    %s594 = sld [smem:[#allocation2 + $0x20b]]
    %v595 = vstv %s594
    %v596 = vsub.f32 %v593, %v595
    %v597 = vmul.f32 %v596, %v596
    %v598 = vadd.f32 %v553, %v597
    %v599 = vmul.f32 %v54, %v561
    %v600 = vmul.f32 %v56, %v569
    %v601 = vadd.f32 %v599, %v600
    %v602 = vmul.f32 %v62, %v577
    %v603 = vadd.f32 %v601, %v602
    %s604 = sld [smem:[#allocation2 + $0x10b]]
    %v605 = vstv %s604
    %v606 = vadd.f32 %v603, %v605
    %v607 = vmul.f32 %v58, %v561
    %v608 = vmul.f32 %v60, %v569
    %v609 = vadd.f32 %v607, %v608
    %v610 = vmul.f32 %v64, %v577
    %v611 = vadd.f32 %v609, %v610
    %s612 = sld [smem:[#allocation2 + $0x18b]]
    %v613 = vstv %s612
    %v614 = vadd.f32 %v611, %v613
    %v615 = vmul.f32 %v585, %v40
    %v616 = vadd.f32 %v615, %v71
    %v617 = vmax.f32 %v616, 0.0
    %v618 = vmul.f32 %v617, %v75
    %v619 = vsel %vm78, %v618, 0.0
    %620 = vadd.xlane.f32.xlu0 %v619
    %v621 = vpop.xlane.xlu0 %620
    %v622 = vadd.f32 %v621, %v66
    %v623 = vmul.f32 %v42, %v606
    %v624 = vmul.f32 %v44, %v614
    %v625 = vadd.f32 %v623, %v624
    %s626 = sld [smem:[#allocation2 + $0xc]]
    %v627 = vstv %s626
    %v628 = vadd.f32 %v625, %v627
    %v629 = vmul.f32 %v46, %v622
    %v630 = vadd.f32 %v628, %v629
    %v631 = vmul.f32 %v48, %v606
    %v632 = vmul.f32 %v50, %v614
    %v633 = vadd.f32 %v631, %v632
    %v634 = vmul.f32 %v52, %v622
    %v635 = vadd.f32 %v633, %v634
    %s636 = sld [smem:[#allocation2 + $0x8c]]
    %v637 = vstv %s636
    %v638 = vadd.f32 %v635, %v637
    %s639 = sld [smem:[#allocation2 + $0x20c]]
    %v640 = vstv %s639
    %v641 = vsub.f32 %v638, %v640
    %v642 = vmul.f32 %v641, %v641
    %v643 = vadd.f32 %v598, %v642
    %v644 = vmul.f32 %v54, %v606
    %v645 = vmul.f32 %v56, %v614
    %v646 = vadd.f32 %v644, %v645
    %v647 = vmul.f32 %v62, %v622
    %v648 = vadd.f32 %v646, %v647
    %s649 = sld [smem:[#allocation2 + $0x10c]]
    %v650 = vstv %s649
    %v651 = vadd.f32 %v648, %v650
    %v652 = vmul.f32 %v58, %v606
    %v653 = vmul.f32 %v60, %v614
    %v654 = vadd.f32 %v652, %v653
    %v655 = vmul.f32 %v64, %v622
    %v656 = vadd.f32 %v654, %v655
    %s657 = sld [smem:[#allocation2 + $0x18c]]
    %v658 = vstv %s657
    %v659 = vadd.f32 %v656, %v658
    %v660 = vmul.f32 %v630, %v40
    %v661 = vadd.f32 %v660, %v71
    %v662 = vmax.f32 %v661, 0.0
    %v663 = vmul.f32 %v662, %v75
    %v664 = vsel %vm78, %v663, 0.0
    %665 = vadd.xlane.f32.xlu0 %v664
    %v666 = vpop.xlane.xlu0 %665
    %v667 = vadd.f32 %v666, %v66
    %v668 = vmul.f32 %v42, %v651
    %v669 = vmul.f32 %v44, %v659
    %v670 = vadd.f32 %v668, %v669
    %s671 = sld [smem:[#allocation2 + $0xd]]
    %v672 = vstv %s671
    %v673 = vadd.f32 %v670, %v672
    %v674 = vmul.f32 %v46, %v667
    %v675 = vadd.f32 %v673, %v674
    %v676 = vmul.f32 %v48, %v651
    %v677 = vmul.f32 %v50, %v659
    %v678 = vadd.f32 %v676, %v677
    %v679 = vmul.f32 %v52, %v667
    %v680 = vadd.f32 %v678, %v679
    %s681 = sld [smem:[#allocation2 + $0x8d]]
    %v682 = vstv %s681
    %v683 = vadd.f32 %v680, %v682
    %s684 = sld [smem:[#allocation2 + $0x20d]]
    %v685 = vstv %s684
    %v686 = vsub.f32 %v683, %v685
    %v687 = vmul.f32 %v686, %v686
    %v688 = vadd.f32 %v643, %v687
    %v689 = vmul.f32 %v54, %v651
    %v690 = vmul.f32 %v56, %v659
    %v691 = vadd.f32 %v689, %v690
    %v692 = vmul.f32 %v62, %v667
    %v693 = vadd.f32 %v691, %v692
    %s694 = sld [smem:[#allocation2 + $0x10d]]
    %v695 = vstv %s694
    %v696 = vadd.f32 %v693, %v695
    %v697 = vmul.f32 %v58, %v651
    %v698 = vmul.f32 %v60, %v659
    %v699 = vadd.f32 %v697, %v698
    %v700 = vmul.f32 %v64, %v667
    %v701 = vadd.f32 %v699, %v700
    %s702 = sld [smem:[#allocation2 + $0x18d]]
    %v703 = vstv %s702
    %v704 = vadd.f32 %v701, %v703
    %v705 = vmul.f32 %v675, %v40
    %v706 = vadd.f32 %v705, %v71
    %v707 = vmax.f32 %v706, 0.0
    %v708 = vmul.f32 %v707, %v75
    %v709 = vsel %vm78, %v708, 0.0
    %710 = vadd.xlane.f32.xlu0 %v709
    %v711 = vpop.xlane.xlu0 %710
    %v712 = vadd.f32 %v711, %v66
    %v713 = vmul.f32 %v42, %v696
    %v714 = vmul.f32 %v44, %v704
    %v715 = vadd.f32 %v713, %v714
    %s716 = sld [smem:[#allocation2 + $0xe]]
    %v717 = vstv %s716
    %v718 = vadd.f32 %v715, %v717
    %v719 = vmul.f32 %v46, %v712
    %v720 = vadd.f32 %v718, %v719
    %v721 = vmul.f32 %v48, %v696
    %v722 = vmul.f32 %v50, %v704
    %v723 = vadd.f32 %v721, %v722
    %v724 = vmul.f32 %v52, %v712
    %v725 = vadd.f32 %v723, %v724
    %s726 = sld [smem:[#allocation2 + $0x8e]]
    %v727 = vstv %s726
    %v728 = vadd.f32 %v725, %v727
    %s729 = sld [smem:[#allocation2 + $0x20e]]
    %v730 = vstv %s729
    %v731 = vsub.f32 %v728, %v730
    %v732 = vmul.f32 %v731, %v731
    %v733 = vadd.f32 %v688, %v732
    %v734 = vmul.f32 %v54, %v696
    %v735 = vmul.f32 %v56, %v704
    %v736 = vadd.f32 %v734, %v735
    %v737 = vmul.f32 %v62, %v712
    %v738 = vadd.f32 %v736, %v737
    %s739 = sld [smem:[#allocation2 + $0x10e]]
    %v740 = vstv %s739
    %v741 = vadd.f32 %v738, %v740
    %v742 = vmul.f32 %v58, %v696
    %v743 = vmul.f32 %v60, %v704
    %v744 = vadd.f32 %v742, %v743
    %v745 = vmul.f32 %v64, %v712
    %v746 = vadd.f32 %v744, %v745
    %s747 = sld [smem:[#allocation2 + $0x18e]]
    %v748 = vstv %s747
    %v749 = vadd.f32 %v746, %v748
    %v750 = vmul.f32 %v720, %v40
    %v751 = vadd.f32 %v750, %v71
    %v752 = vmax.f32 %v751, 0.0
    %v753 = vmul.f32 %v752, %v75
    %v754 = vsel %vm78, %v753, 0.0
    %755 = vadd.xlane.f32.xlu0 %v754
    %v756 = vpop.xlane.xlu0 %755
    %v757 = vadd.f32 %v756, %v66
    %v758 = vmul.f32 %v48, %v741
    %v759 = vmul.f32 %v50, %v749
    %v760 = vadd.f32 %v758, %v759
    %v761 = vmul.f32 %v52, %v757
    %v762 = vadd.f32 %v760, %v761
    %s763 = sld [smem:[#allocation2 + $0x8f]]
    %v764 = vstv %s763
    %v765 = vadd.f32 %v762, %v764
    %s766 = sld [smem:[#allocation2 + $0x20f]]
    %v767 = vstv %s766
    %v768 = vsub.f32 %v765, %v767
    %v769 = vmul.f32 %v768, %v768
    %v770 = vadd.f32 %v733, %v769
    %v771 = vmul.f32 %v770, 0.0625
    %vm772 = vcmask 0
    %773 = vst.msk [vmem:[#allocation7] sm:$0x1] %vm772, %v771
    // Predicated region
    $region22: #{model_closure_loss.1} parent=1 // pred_check
      _
    $region23: #{model_closure_loss.1} parent=1 // pred_check_branch
      %775 = sbr.rel (0) target = $region25
    $region24: #{model_closure_loss.1} parent=1 // pred_region
      %s777 = ssub.s32 16, 16
      %778 = vsyncadd [#allocation3], %s777
      %s780 = sshll.u32 [#allocation7], 4
      %s781 = int_to_ptr.vmem [resolvable:$true] %s780
      %783 = dma.vmem_to_hbm [thread:$0]  %s781, 16, %s3, [#allocation3]
    $region25: #{model_closure_loss.1} parent=1 // pred_fallthru
      _
    // Predicated region
    $region26: #{model_closure_loss.1} parent=1 // pred_check
      _
    $region27: #{model_closure_loss.1} parent=1 // pred_check_branch
      %785 = sbr.rel (0) target = $region29
    $region28: #{model_closure_loss.1} parent=1 // pred_region
      %786 = dma.done [#allocation3], 16
    $region29: #{model_closure_loss.1} parent=1 // pred_fallthru
      _
    %787 = vsyncpa [#allocation3], 1
    %788 = vsyncpa [#allocation4], 1
    %789 = vsyncpa [#allocation6], 1

</llo_original>
